<compile_context>
chip_gen: v7x
topology: tpu7x:2x2x1
jax: 0.10.0
libtpu: 0.0.40
codegen_flags: <defaults>
</compile_context>

<pallas_src>
import math

import jax
import jax.numpy as jnp
from jax.experimental import pallas as pl
from jax.experimental.pallas import tpu as pltpu

# ----- configuration (matches constants in the PyTorch file) -----------------
D_MODEL = 10
D_MLP = 24
VOCAB_SIZE = 10
MAX_LENGTH = 50
SEQ_LEN = 3
NUM_HEADS = 2            # must divide d_model (10 / 2 = 5)
N_BLOCKS = 2
TEMPERATURE = 1.0
EPS = 1e-6
BATCH = 2
D_QKV = D_MODEL // NUM_HEADS
BS = BATCH * SEQ_LEN


# ----- single fused kernel: N decoder blocks + final LN + vocab projection ----
def transformer_kernel(x_ref, bias_ref, wqkv_ref, wo_ref,
                       ln_a_ref, ln_b_ref,
                       w1_ref, b1_ref, w2_ref, b2_ref,
                       wp_ref, bp_ref, out_ref):
    """All activations are (B*S, D) 2-D slabs.  Attention runs over all B*S
    tokens at once; the additive bias masks cross-batch pairs in addition to
    the reference mask, which is numerically identical to per-batch softmax."""

    def layernorm(v, idx):
        a = ln_a_ref[idx:idx + 1, :]          # (1, D), static slice
        b = ln_b_ref[idx:idx + 1, :]
        mu = jnp.mean(v, axis=-1, keepdims=True)
        var = jnp.mean((v - mu) ** 2, axis=-1, keepdims=True)
        return (v - mu) * jax.lax.rsqrt(var + EPS) * a + b

    x = x_ref[...]                            # (BS, D) f32
    bias = bias_ref[...]                      # (BS, BS) additive mask bias

    for blk in range(N_BLOCKS):               # static loop: tiny model, fully unrolled
        # ---- residual 1: pre-norm multi-head self-attention ----
        xn = layernorm(x, 2 * blk)
        att = jnp.zeros((BS, D_MODEL), jnp.float32)
        for h in range(NUM_HEADS):            # static loop; weights pre-split per head
            q = jnp.dot(xn, wqkv_ref[blk * 3 * NUM_HEADS + 0 * NUM_HEADS + h],
                        preferred_element_type=jnp.float32)      # (BS, Dh); scale folded in
            k = jnp.dot(xn, wqkv_ref[blk * 3 * NUM_HEADS + 1 * NUM_HEADS + h],
                        preferred_element_type=jnp.float32)
            v = jnp.dot(xn, wqkv_ref[blk * 3 * NUM_HEADS + 2 * NUM_HEADS + h],
                        preferred_element_type=jnp.float32)
            s = jnp.einsum("qd,kd->qk", q, k,
                           preferred_element_type=jnp.float32) + bias      # (BS, BS)
            s = s - jnp.max(s, axis=-1, keepdims=True)
            p = jnp.exp(s)
            p = p * pl.reciprocal(jnp.sum(p, axis=-1, keepdims=True), approx=True)
            # TODO(synk): attention dropout (p=0.1) is identity at inference; skipped.
            hv = jnp.dot(p, v, preferred_element_type=jnp.float32)          # (BS, Dh)
            att = att + jnp.dot(hv, wo_ref[blk * NUM_HEADS + h],
                                preferred_element_type=jnp.float32)         # (BS, D)
        x = x + att

        # ---- residual 2: pre-norm MLP ----
        yn = layernorm(x, 2 * blk + 1)
        h1 = jnp.dot(yn, w1_ref[blk],
                     preferred_element_type=jnp.float32) + b1_ref[blk:blk + 1, :]
        h1 = jnp.maximum(h1, 0.0)
        h2 = jnp.dot(h1, w2_ref[blk],
                     preferred_element_type=jnp.float32) + b2_ref[blk:blk + 1, :]
        x = x + h2

    # ---- final decoder LayerNorm + vocab projection ----
    xf = layernorm(x, 2 * N_BLOCKS)
    out_ref[...] = jnp.dot(xf, wp_ref[...],
                           preferred_element_type=jnp.float32) + bp_ref[...]


# ----- pallas_call wrapper ----------------------------------------------------
def _vmem():
    return pl.BlockSpec(memory_space=pltpu.MemorySpace.VMEM)


def sinusoidal_pos_encoding(max_len, d_model):
    pos = jnp.arange(max_len, dtype=jnp.float32)[:, None]
    i = jnp.arange(0, d_model, 2, dtype=jnp.float32)
    div = jnp.exp(-math.log(10000.0) * i / d_model)
    pe = jnp.zeros((max_len, d_model), jnp.float32)
    pe = pe.at[:, 0::2].set(jnp.sin(pos * div))
    pe = pe.at[:, 1::2].set(jnp.cos(pos * div))
    return pe


def transformer_forward(packed, tokens, mask):
    B, S = tokens.shape
    # embedding (scaled by sqrt(d_model)) + sinusoidal positional encoding (glue)
    x = packed["emb"][tokens] * jnp.float32(math.sqrt(D_MODEL))
    x = x + sinusoidal_pos_encoding(MAX_LENGTH, D_MODEL)[:S][None]
    x2d = x.reshape(B * S, D_MODEL).astype(jnp.float32)

    # Additive attention-mask bias on the flattened (B*S, B*S) score matrix:
    # masks (a) cross-batch pairs, (b) reference mask==0 positions; the value
    # -1e9/temperature matches masked_fill(-1e9) followed by /temperature.
    batch_ids = jnp.arange(B * S, dtype=jnp.int32) // S
    same_batch = batch_ids[:, None] == batch_ids[None, :]
    keep = same_batch & (jnp.tile(mask[0], (B, B)) != 0.0)
    bias = jnp.where(keep, 0.0, jnp.float32(-1e9 / TEMPERATURE)).astype(jnp.float32)

    args = (x2d, bias, packed["wqkv"], packed["wo"],
            packed["ln_a"], packed["ln_b"],
            packed["w1"], packed["b1"], packed["w2"], packed["b2"],
            packed["wp"], packed["bp"])
    out = pl.pallas_call(
        transformer_kernel,
        out_shape=jax.ShapeDtypeStruct((B * S, VOCAB_SIZE), jnp.float32),
        in_specs=[_vmem() for _ in args],
        out_specs=_vmem(),
    )(*args)
    return out.reshape(B, S, VOCAB_SIZE)


# ----- parameter init (deterministic, PyTorch-Linear-style uniform) + packing --
def _linear_w(key, out_f, in_f):
    bound = 1.0 / math.sqrt(in_f)
    return jax.random.uniform(key, (out_f, in_f), jnp.float32, -bound, bound)


def _linear_b(key, out_f, in_f):
    bound = 1.0 / math.sqrt(in_f)
    return jax.random.uniform(key, (out_f,), jnp.float32, -bound, bound)


def init_and_pack_params(key):
    keys = jax.random.split(key, 2 + N_BLOCKS)
    emb = jax.random.normal(keys[0], (VOCAB_SIZE, D_MODEL), jnp.float32)
    kp1, kp2 = jax.random.split(keys[1])
    w_proj = _linear_w(kp1, VOCAB_SIZE, D_MODEL)          # (V, D)
    b_proj = _linear_b(kp2, VOCAB_SIZE, D_MODEL)          # (V,)

    scale = 1.0 / (math.sqrt(D_QKV) * TEMPERATURE)
    wqkv, wo, ln_a, ln_b = [], [], [], []
    w1, b1, w2, b2 = [], [], [], []
    for b in range(N_BLOCKS):
        ks = jax.random.split(keys[2 + b], 9)
        wq_ = _linear_w(ks[0], D_MODEL, D_MODEL)
        wk_ = _linear_w(ks[1], D_MODEL, D_MODEL)
        wv_ = _linear_w(ks[2], D_MODEL, D_MODEL)
        hq_ = _linear_w(ks[3], D_MODEL, D_MODEL)
        wo_ = _linear_w(ks[4], D_MODEL, D_MODEL)
        # Fold H_Q into W_Q/W_K/W_V (reference applies H_Q to all three; both
        # linears are bias-free): HQ = E @ (H_Q @ W_Q)^T etc.  Pre-transpose to
        # (in, out) layout, fold score scale into the Q weight, split per head.
        fq = (hq_ @ wq_).T * scale                        # (D, D)
        fk = (hq_ @ wk_).T
        fv = (hq_ @ wv_).T
        woT = wo_.T                                       # (D, D)
        for mat in (fq, fk, fv):                          # order: q, k, v
            for h in range(NUM_HEADS):
                wqkv.append(mat[:, h * D_QKV:(h + 1) * D_QKV])     # (D, Dh)
        for h in range(NUM_HEADS):
            wo.append(woT[h * D_QKV:(h + 1) * D_QKV, :])           # (Dh, D)
        ln_a += [jnp.ones((D_MODEL,), jnp.float32),                # ln1 (idx 2b)
                 jnp.ones((D_MODEL,), jnp.float32)]                # ln2 (idx 2b+1)
        ln_b += [jnp.zeros((D_MODEL,), jnp.float32),
                 jnp.zeros((D_MODEL,), jnp.float32)]
        w1.append(_linear_w(ks[5], D_MLP, D_MODEL).T)              # (D, D_MLP)
        b1.append(_linear_b(ks[6], D_MLP, D_MODEL))                # (D_MLP,)
        w2.append(_linear_w(ks[7], D_MODEL, D_MLP).T)              # (D_MLP, D)
        b2.append(_linear_b(ks[8], D_MODEL, D_MLP))                # (D,)
    ln_a.append(jnp.ones((D_MODEL,), jnp.float32))                 # final decoder LN
    ln_b.append(jnp.zeros((D_MODEL,), jnp.float32))

    return {
        "emb": emb,
        "wqkv": jnp.stack(wqkv),          # (N*3*H, D, Dh) = (12, 10, 5)
        "wo": jnp.stack(wo),              # (N*H, Dh, D)   = (4, 5, 10)
        "ln_a": jnp.stack(ln_a),          # (2N+1, D)
        "ln_b": jnp.stack(ln_b),          # (2N+1, D)
        "w1": jnp.stack(w1),              # (N, D, D_MLP)
        "b1": jnp.stack(b1),              # (N, D_MLP)
        "w2": jnp.stack(w2),              # (N, D_MLP, D)
        "b2": jnp.stack(b2),              # (N, D)
        "wp": w_proj.T,                   # (D, V)
        "bp": b_proj[None, :],            # (1, V)
    }


if __name__ == "__main__":
    key = jax.random.PRNGKey(0)
    pkey, xkey = jax.random.split(key)
    packed = init_and_pack_params(pkey)

    tokens = jax.random.randint(xkey, (BATCH, SEQ_LEN), 0, VOCAB_SIZE, dtype=jnp.int32)
    # mask as built in Transformer.generate(): triu(ones, diagonal=0), unsqueezed (1, S, S).
    # NOTE: keeps diagonal + FUTURE, masks PAST — faithful to the reference.
    mask = jnp.triu(jnp.ones((SEQ_LEN, SEQ_LEN), jnp.float32), k=0)[None]

    logits = transformer_forward(packed, tokens, mask)
    jax.block_until_ready(logits)
    assert logits.shape == (BATCH, SEQ_LEN, VOCAB_SIZE)
    assert bool(jnp.all(jnp.isfinite(logits)))
    print("KERNEL_OK")
</pallas_src>

<mosaic_0001>
module attributes {stable_mosaic.version = 11 : i64} {
  func.func @transformer_kernel(%arg0: memref<6x10xf32, #tpu.memory_space<vmem>>, %arg1: memref<6x6xf32, #tpu.memory_space<vmem>>, %arg2: memref<12x10x5xf32, #tpu.memory_space<vmem>>, %arg3: memref<4x5x10xf32, #tpu.memory_space<vmem>>, %arg4: memref<5x10xf32, #tpu.memory_space<vmem>>, %arg5: memref<5x10xf32, #tpu.memory_space<vmem>>, %arg6: memref<2x10x24xf32, #tpu.memory_space<vmem>>, %arg7: memref<2x24xf32, #tpu.memory_space<vmem>>, %arg8: memref<2x24x10xf32, #tpu.memory_space<vmem>>, %arg9: memref<2x10xf32, #tpu.memory_space<vmem>>, %arg10: memref<10x10xf32, #tpu.memory_space<vmem>>, %arg11: memref<1x10xf32, #tpu.memory_space<vmem>>, %arg12: memref<6x10xf32, #tpu.memory_space<vmem>>) attributes {dimension_semantics = [], scalar_prefetch = 0 : i64, scratch_operands = 0 : i64, tpu.core_type = #tpu.core_type<tc>} {
    %c0 = arith.constant 0 : index
    %c0_0 = arith.constant 0 : index
    %0 = vector.load %arg0[%c0, %c0_0] : memref<6x10xf32, #tpu.memory_space<vmem>>, vector<6x10xf32>
    %c0_1 = arith.constant 0 : index
    %c0_2 = arith.constant 0 : index
    %1 = vector.load %arg1[%c0_1, %c0_2] : memref<6x6xf32, #tpu.memory_space<vmem>>, vector<6x6xf32>
    %c0_3 = arith.constant 0 : index
    %c0_4 = arith.constant 0 : index
    %2 = vector.load %arg4[%c0_3, %c0_4] : memref<5x10xf32, #tpu.memory_space<vmem>>, vector<1x10xf32>
    %c0_5 = arith.constant 0 : index
    %c0_6 = arith.constant 0 : index
    %3 = vector.load %arg5[%c0_5, %c0_6] : memref<5x10xf32, #tpu.memory_space<vmem>>, vector<1x10xf32>
    %cst = arith.constant dense<0.000000e+00> : vector<6xf32>
    %4 = vector.multi_reduction <add>, %0, %cst [1] : vector<6x10xf32> to vector<6xf32>
    %5 = vector.shape_cast %4 : vector<6xf32> to vector<6x1xf32>
    %cst_7 = arith.constant 1.000000e+01 : f32
    %6 = vector.broadcast %cst_7 : f32 to vector<6x1xf32>
    %7 = arith.divf %5, %6 : vector<6x1xf32>
    %8 = vector.broadcast %7 : vector<6x1xf32> to vector<6x10xf32>
    %9 = arith.subf %0, %8 : vector<6x10xf32>
    %10 = arith.mulf %9, %9 : vector<6x10xf32>
    %cst_8 = arith.constant dense<0.000000e+00> : vector<6xf32>
    %11 = vector.multi_reduction <add>, %10, %cst_8 [1] : vector<6x10xf32> to vector<6xf32>
    %12 = vector.shape_cast %11 : vector<6xf32> to vector<6x1xf32>
    %cst_9 = arith.constant 1.000000e+01 : f32
    %13 = vector.broadcast %cst_9 : f32 to vector<6x1xf32>
    %14 = arith.divf %12, %13 : vector<6x1xf32>
    %15 = vector.broadcast %7 : vector<6x1xf32> to vector<6x10xf32>
    %16 = arith.subf %0, %15 : vector<6x10xf32>
    %cst_10 = arith.constant 9.99999997E-7 : f32
    %17 = vector.broadcast %cst_10 : f32 to vector<6x1xf32>
    %18 = arith.addf %14, %17 : vector<6x1xf32>
    %19 = math.rsqrt %18 : vector<6x1xf32>
    %20 = vector.broadcast %19 : vector<6x1xf32> to vector<6x10xf32>
    %21 = arith.mulf %16, %20 : vector<6x10xf32>
    %22 = vector.broadcast %2 : vector<1x10xf32> to vector<6x10xf32>
    %23 = arith.mulf %21, %22 : vector<6x10xf32>
    %24 = vector.broadcast %3 : vector<1x10xf32> to vector<6x10xf32>
    %25 = arith.addf %23, %24 : vector<6x10xf32>
    %cst_11 = arith.constant 0.000000e+00 : f32
    %26 = vector.broadcast %cst_11 : f32 to vector<6x10xf32>
    %c0_12 = arith.constant 0 : index
    %c0_13 = arith.constant 0 : index
    %c0_14 = arith.constant 0 : index
    %27 = vector.load %arg2[%c0_12, %c0_13, %c0_14] : memref<12x10x5xf32, #tpu.memory_space<vmem>>, vector<1x10x5xf32>
    %28 = vector.shape_cast %27 : vector<1x10x5xf32> to vector<10x5xf32>
    %cst_15 = arith.constant dense<0.000000e+00> : vector<6x5xf32>
    %29 = tpu.matmul %25, %28, %cst_15 {dimension_numbers = #tpu.dot_dimension_numbers<[1], [0], [0], [1], [0, 0, 1, 1], [], []>} : vector<6x10xf32>, vector<10x5xf32>, vector<6x5xf32> -> vector<6x5xf32>
    %c2 = arith.constant 2 : index
    %c0_16 = arith.constant 0 : index
    %c0_17 = arith.constant 0 : index
    %30 = vector.load %arg2[%c2, %c0_16, %c0_17] : memref<12x10x5xf32, #tpu.memory_space<vmem>>, vector<1x10x5xf32>
    %31 = vector.shape_cast %30 : vector<1x10x5xf32> to vector<10x5xf32>
    %cst_18 = arith.constant dense<0.000000e+00> : vector<6x5xf32>
    %32 = tpu.matmul %25, %31, %cst_18 {dimension_numbers = #tpu.dot_dimension_numbers<[1], [0], [0], [1], [0, 0, 1, 1], [], []>} : vector<6x10xf32>, vector<10x5xf32>, vector<6x5xf32> -> vector<6x5xf32>
    %c4 = arith.constant 4 : index
    %c0_19 = arith.constant 0 : index
    %c0_20 = arith.constant 0 : index
    %33 = vector.load %arg2[%c4, %c0_19, %c0_20] : memref<12x10x5xf32, #tpu.memory_space<vmem>>, vector<1x10x5xf32>
    %34 = vector.shape_cast %33 : vector<1x10x5xf32> to vector<10x5xf32>
    %cst_21 = arith.constant dense<0.000000e+00> : vector<6x5xf32>
    %35 = tpu.matmul %25, %34, %cst_21 {dimension_numbers = #tpu.dot_dimension_numbers<[1], [0], [0], [1], [0, 0, 1, 1], [], []>} : vector<6x10xf32>, vector<10x5xf32>, vector<6x5xf32> -> vector<6x5xf32>
    "tpu.trace_start"() <{level = 10 : i32, message = "qd,kd->qk"}> : () -> ()
    %cst_22 = arith.constant dense<0.000000e+00> : vector<6x6xf32>
    %36 = tpu.matmul %29, %32, %cst_22 {dimension_numbers = #tpu.dot_dimension_numbers<[1], [1], [0], [0], [0, 0, 1, 0], [], []>} : vector<6x5xf32>, vector<6x5xf32>, vector<6x6xf32> -> vector<6x6xf32>
    "tpu.trace_stop"() : () -> ()
    %37 = arith.addf %36, %1 : vector<6x6xf32>
    %cst_23 = arith.constant dense<0xFF800000> : vector<6xf32>
    %38 = vector.multi_reduction <maximumf>, %37, %cst_23 [1] : vector<6x6xf32> to vector<6xf32>
    %39 = vector.shape_cast %38 : vector<6xf32> to vector<6x1xf32>
    %40 = vector.broadcast %39 : vector<6x1xf32> to vector<6x6xf32>
    %41 = arith.subf %37, %40 : vector<6x6xf32>
    %42 = math.exp %41 : vector<6x6xf32>
    %cst_24 = arith.constant dense<0.000000e+00> : vector<6xf32>
    %43 = vector.multi_reduction <add>, %42, %cst_24 [1] : vector<6x6xf32> to vector<6xf32>
    %44 = vector.shape_cast %43 : vector<6xf32> to vector<6x1xf32>
    %45 = tpu.reciprocal %44 {approx = true} : vector<6x1xf32> -> vector<6x1xf32>
    %46 = vector.broadcast %45 : vector<6x1xf32> to vector<6x6xf32>
    %47 = arith.mulf %42, %46 : vector<6x6xf32>
    %cst_25 = arith.constant dense<0.000000e+00> : vector<6x5xf32>
    %48 = tpu.matmul %47, %35, %cst_25 {dimension_numbers = #tpu.dot_dimension_numbers<[1], [0], [0], [1], [0, 0, 1, 1], [], []>} : vector<6x6xf32>, vector<6x5xf32>, vector<6x5xf32> -> vector<6x5xf32>
    %c0_26 = arith.constant 0 : index
    %c0_27 = arith.constant 0 : index
    %c0_28 = arith.constant 0 : index
    %49 = vector.load %arg3[%c0_26, %c0_27, %c0_28] : memref<4x5x10xf32, #tpu.memory_space<vmem>>, vector<1x5x10xf32>
    %50 = vector.shape_cast %49 : vector<1x5x10xf32> to vector<5x10xf32>
    %cst_29 = arith.constant dense<0.000000e+00> : vector<6x10xf32>
    %51 = tpu.matmul %48, %50, %cst_29 {dimension_numbers = #tpu.dot_dimension_numbers<[1], [0], [0], [1], [0, 0, 1, 1], [], []>} : vector<6x5xf32>, vector<5x10xf32>, vector<6x10xf32> -> vector<6x10xf32>
    %52 = arith.addf %26, %51 : vector<6x10xf32>
    %c1 = arith.constant 1 : index
    %c0_30 = arith.constant 0 : index
    %c0_31 = arith.constant 0 : index
    %53 = vector.load %arg2[%c1, %c0_30, %c0_31] : memref<12x10x5xf32, #tpu.memory_space<vmem>>, vector<1x10x5xf32>
    %54 = vector.shape_cast %53 : vector<1x10x5xf32> to vector<10x5xf32>
    %cst_32 = arith.constant dense<0.000000e+00> : vector<6x5xf32>
    %55 = tpu.matmul %25, %54, %cst_32 {dimension_numbers = #tpu.dot_dimension_numbers<[1], [0], [0], [1], [0, 0, 1, 1], [], []>} : vector<6x10xf32>, vector<10x5xf32>, vector<6x5xf32> -> vector<6x5xf32>
    %c3 = arith.constant 3 : index
    %c0_33 = arith.constant 0 : index
    %c0_34 = arith.constant 0 : index
    %56 = vector.load %arg2[%c3, %c0_33, %c0_34] : memref<12x10x5xf32, #tpu.memory_space<vmem>>, vector<1x10x5xf32>
    %57 = vector.shape_cast %56 : vector<1x10x5xf32> to vector<10x5xf32>
    %cst_35 = arith.constant dense<0.000000e+00> : vector<6x5xf32>
    %58 = tpu.matmul %25, %57, %cst_35 {dimension_numbers = #tpu.dot_dimension_numbers<[1], [0], [0], [1], [0, 0, 1, 1], [], []>} : vector<6x10xf32>, vector<10x5xf32>, vector<6x5xf32> -> vector<6x5xf32>
    %c5 = arith.constant 5 : index
    %c0_36 = arith.constant 0 : index
    %c0_37 = arith.constant 0 : index
    %59 = vector.load %arg2[%c5, %c0_36, %c0_37] : memref<12x10x5xf32, #tpu.memory_space<vmem>>, vector<1x10x5xf32>
    %60 = vector.shape_cast %59 : vector<1x10x5xf32> to vector<10x5xf32>
    %cst_38 = arith.constant dense<0.000000e+00> : vector<6x5xf32>
    %61 = tpu.matmul %25, %60, %cst_38 {dimension_numbers = #tpu.dot_dimension_numbers<[1], [0], [0], [1], [0, 0, 1, 1], [], []>} : vector<6x10xf32>, vector<10x5xf32>, vector<6x5xf32> -> vector<6x5xf32>
    "tpu.trace_start"() <{level = 10 : i32, message = "qd,kd->qk"}> : () -> ()
    %cst_39 = arith.constant dense<0.000000e+00> : vector<6x6xf32>
    %62 = tpu.matmul %55, %58, %cst_39 {dimension_numbers = #tpu.dot_dimension_numbers<[1], [1], [0], [0], [0, 0, 1, 0], [], []>} : vector<6x5xf32>, vector<6x5xf32>, vector<6x6xf32> -> vector<6x6xf32>
    "tpu.trace_stop"() : () -> ()
    %63 = arith.addf %62, %1 : vector<6x6xf32>
    %cst_40 = arith.constant dense<0xFF800000> : vector<6xf32>
    %64 = vector.multi_reduction <maximumf>, %63, %cst_40 [1] : vector<6x6xf32> to vector<6xf32>
    %65 = vector.shape_cast %64 : vector<6xf32> to vector<6x1xf32>
    %66 = vector.broadcast %65 : vector<6x1xf32> to vector<6x6xf32>
    %67 = arith.subf %63, %66 : vector<6x6xf32>
    %68 = math.exp %67 : vector<6x6xf32>
    %cst_41 = arith.constant dense<0.000000e+00> : vector<6xf32>
    %69 = vector.multi_reduction <add>, %68, %cst_41 [1] : vector<6x6xf32> to vector<6xf32>
    %70 = vector.shape_cast %69 : vector<6xf32> to vector<6x1xf32>
    %71 = tpu.reciprocal %70 {approx = true} : vector<6x1xf32> -> vector<6x1xf32>
    %72 = vector.broadcast %71 : vector<6x1xf32> to vector<6x6xf32>
    %73 = arith.mulf %68, %72 : vector<6x6xf32>
    %cst_42 = arith.constant dense<0.000000e+00> : vector<6x5xf32>
    %74 = tpu.matmul %73, %61, %cst_42 {dimension_numbers = #tpu.dot_dimension_numbers<[1], [0], [0], [1], [0, 0, 1, 1], [], []>} : vector<6x6xf32>, vector<6x5xf32>, vector<6x5xf32> -> vector<6x5xf32>
    %c1_43 = arith.constant 1 : index
    %c0_44 = arith.constant 0 : index
    %c0_45 = arith.constant 0 : index
    %75 = vector.load %arg3[%c1_43, %c0_44, %c0_45] : memref<4x5x10xf32, #tpu.memory_space<vmem>>, vector<1x5x10xf32>
    %76 = vector.shape_cast %75 : vector<1x5x10xf32> to vector<5x10xf32>
    %cst_46 = arith.constant dense<0.000000e+00> : vector<6x10xf32>
    %77 = tpu.matmul %74, %76, %cst_46 {dimension_numbers = #tpu.dot_dimension_numbers<[1], [0], [0], [1], [0, 0, 1, 1], [], []>} : vector<6x5xf32>, vector<5x10xf32>, vector<6x10xf32> -> vector<6x10xf32>
    %78 = arith.addf %52, %77 : vector<6x10xf32>
    %79 = arith.addf %0, %78 : vector<6x10xf32>
    %c1_47 = arith.constant 1 : index
    %c0_48 = arith.constant 0 : index
    %80 = vector.load %arg4[%c1_47, %c0_48] : memref<5x10xf32, #tpu.memory_space<vmem>>, vector<1x10xf32>
    %c1_49 = arith.constant 1 : index
    %c0_50 = arith.constant 0 : index
    %81 = vector.load %arg5[%c1_49, %c0_50] : memref<5x10xf32, #tpu.memory_space<vmem>>, vector<1x10xf32>
    %cst_51 = arith.constant dense<0.000000e+00> : vector<6xf32>
    %82 = vector.multi_reduction <add>, %79, %cst_51 [1] : vector<6x10xf32> to vector<6xf32>
    %83 = vector.shape_cast %82 : vector<6xf32> to vector<6x1xf32>
    %cst_52 = arith.constant 1.000000e+01 : f32
    %84 = vector.broadcast %cst_52 : f32 to vector<6x1xf32>
    %85 = arith.divf %83, %84 : vector<6x1xf32>
    %86 = vector.broadcast %85 : vector<6x1xf32> to vector<6x10xf32>
    %87 = arith.subf %79, %86 : vector<6x10xf32>
    %88 = arith.mulf %87, %87 : vector<6x10xf32>
    %cst_53 = arith.constant dense<0.000000e+00> : vector<6xf32>
    %89 = vector.multi_reduction <add>, %88, %cst_53 [1] : vector<6x10xf32> to vector<6xf32>
    %90 = vector.shape_cast %89 : vector<6xf32> to vector<6x1xf32>
    %cst_54 = arith.constant 1.000000e+01 : f32
    %91 = vector.broadcast %cst_54 : f32 to vector<6x1xf32>
    %92 = arith.divf %90, %91 : vector<6x1xf32>
    %93 = vector.broadcast %85 : vector<6x1xf32> to vector<6x10xf32>
    %94 = arith.subf %79, %93 : vector<6x10xf32>
    %cst_55 = arith.constant 9.99999997E-7 : f32
    %95 = vector.broadcast %cst_55 : f32 to vector<6x1xf32>
    %96 = arith.addf %92, %95 : vector<6x1xf32>
    %97 = math.rsqrt %96 : vector<6x1xf32>
    %98 = vector.broadcast %97 : vector<6x1xf32> to vector<6x10xf32>
    %99 = arith.mulf %94, %98 : vector<6x10xf32>
    %100 = vector.broadcast %80 : vector<1x10xf32> to vector<6x10xf32>
    %101 = arith.mulf %99, %100 : vector<6x10xf32>
    %102 = vector.broadcast %81 : vector<1x10xf32> to vector<6x10xf32>
    %103 = arith.addf %101, %102 : vector<6x10xf32>
    %c0_56 = arith.constant 0 : index
    %c0_57 = arith.constant 0 : index
    %c0_58 = arith.constant 0 : index
    %104 = vector.load %arg6[%c0_56, %c0_57, %c0_58] : memref<2x10x24xf32, #tpu.memory_space<vmem>>, vector<1x10x24xf32>
    %105 = vector.shape_cast %104 : vector<1x10x24xf32> to vector<10x24xf32>
    %cst_59 = arith.constant dense<0.000000e+00> : vector<6x24xf32>
    %106 = tpu.matmul %103, %105, %cst_59 {dimension_numbers = #tpu.dot_dimension_numbers<[1], [0], [0], [1], [0, 0, 1, 1], [], []>} : vector<6x10xf32>, vector<10x24xf32>, vector<6x24xf32> -> vector<6x24xf32>
    %c0_60 = arith.constant 0 : index
    %c0_61 = arith.constant 0 : index
    %107 = vector.load %arg7[%c0_60, %c0_61] : memref<2x24xf32, #tpu.memory_space<vmem>>, vector<1x24xf32>
    %108 = vector.broadcast %107 : vector<1x24xf32> to vector<6x24xf32>
    %109 = arith.addf %106, %108 : vector<6x24xf32>
    %cst_62 = arith.constant 0.000000e+00 : f32
    %110 = vector.broadcast %cst_62 : f32 to vector<6x24xf32>
    %111 = arith.maximumf %109, %110 : vector<6x24xf32>
    %c0_63 = arith.constant 0 : index
    %c0_64 = arith.constant 0 : index
    %c0_65 = arith.constant 0 : index
    %112 = vector.load %arg8[%c0_63, %c0_64, %c0_65] : memref<2x24x10xf32, #tpu.memory_space<vmem>>, vector<1x24x10xf32>
    %113 = vector.shape_cast %112 : vector<1x24x10xf32> to vector<24x10xf32>
    %cst_66 = arith.constant dense<0.000000e+00> : vector<6x10xf32>
    %114 = tpu.matmul %111, %113, %cst_66 {dimension_numbers = #tpu.dot_dimension_numbers<[1], [0], [0], [1], [0, 0, 1, 1], [], []>} : vector<6x24xf32>, vector<24x10xf32>, vector<6x10xf32> -> vector<6x10xf32>
    %c0_67 = arith.constant 0 : index
    %c0_68 = arith.constant 0 : index
    %115 = vector.load %arg9[%c0_67, %c0_68] : memref<2x10xf32, #tpu.memory_space<vmem>>, vector<1x10xf32>
    %116 = vector.broadcast %115 : vector<1x10xf32> to vector<6x10xf32>
    %117 = arith.addf %114, %116 : vector<6x10xf32>
    %118 = arith.addf %79, %117 : vector<6x10xf32>
    %c2_69 = arith.constant 2 : index
    %c0_70 = arith.constant 0 : index
    %119 = vector.load %arg4[%c2_69, %c0_70] : memref<5x10xf32, #tpu.memory_space<vmem>>, vector<1x10xf32>
    %c2_71 = arith.constant 2 : index
    %c0_72 = arith.constant 0 : index
    %120 = vector.load %arg5[%c2_71, %c0_72] : memref<5x10xf32, #tpu.memory_space<vmem>>, vector<1x10xf32>
    %cst_73 = arith.constant dense<0.000000e+00> : vector<6xf32>
    %121 = vector.multi_reduction <add>, %118, %cst_73 [1] : vector<6x10xf32> to vector<6xf32>
    %122 = vector.shape_cast %121 : vector<6xf32> to vector<6x1xf32>
    %cst_74 = arith.constant 1.000000e+01 : f32
    %123 = vector.broadcast %cst_74 : f32 to vector<6x1xf32>
    %124 = arith.divf %122, %123 : vector<6x1xf32>
    %125 = vector.broadcast %124 : vector<6x1xf32> to vector<6x10xf32>
    %126 = arith.subf %118, %125 : vector<6x10xf32>
    %127 = arith.mulf %126, %126 : vector<6x10xf32>
    %cst_75 = arith.constant dense<0.000000e+00> : vector<6xf32>
    %128 = vector.multi_reduction <add>, %127, %cst_75 [1] : vector<6x10xf32> to vector<6xf32>
    %129 = vector.shape_cast %128 : vector<6xf32> to vector<6x1xf32>
    %cst_76 = arith.constant 1.000000e+01 : f32
    %130 = vector.broadcast %cst_76 : f32 to vector<6x1xf32>
    %131 = arith.divf %129, %130 : vector<6x1xf32>
    %132 = vector.broadcast %124 : vector<6x1xf32> to vector<6x10xf32>
    %133 = arith.subf %118, %132 : vector<6x10xf32>
    %cst_77 = arith.constant 9.99999997E-7 : f32
    %134 = vector.broadcast %cst_77 : f32 to vector<6x1xf32>
    %135 = arith.addf %131, %134 : vector<6x1xf32>
    %136 = math.rsqrt %135 : vector<6x1xf32>
    %137 = vector.broadcast %136 : vector<6x1xf32> to vector<6x10xf32>
    %138 = arith.mulf %133, %137 : vector<6x10xf32>
    %139 = vector.broadcast %119 : vector<1x10xf32> to vector<6x10xf32>
    %140 = arith.mulf %138, %139 : vector<6x10xf32>
    %141 = vector.broadcast %120 : vector<1x10xf32> to vector<6x10xf32>
    %142 = arith.addf %140, %141 : vector<6x10xf32>
    %cst_78 = arith.constant 0.000000e+00 : f32
    %143 = vector.broadcast %cst_78 : f32 to vector<6x10xf32>
    %c6 = arith.constant 6 : index
    %c0_79 = arith.constant 0 : index
    %c0_80 = arith.constant 0 : index
    %144 = vector.load %arg2[%c6, %c0_79, %c0_80] : memref<12x10x5xf32, #tpu.memory_space<vmem>>, vector<1x10x5xf32>
    %145 = vector.shape_cast %144 : vector<1x10x5xf32> to vector<10x5xf32>
    %cst_81 = arith.constant dense<0.000000e+00> : vector<6x5xf32>
    %146 = tpu.matmul %142, %145, %cst_81 {dimension_numbers = #tpu.dot_dimension_numbers<[1], [0], [0], [1], [0, 0, 1, 1], [], []>} : vector<6x10xf32>, vector<10x5xf32>, vector<6x5xf32> -> vector<6x5xf32>
    %c8 = arith.constant 8 : index
    %c0_82 = arith.constant 0 : index
    %c0_83 = arith.constant 0 : index
    %147 = vector.load %arg2[%c8, %c0_82, %c0_83] : memref<12x10x5xf32, #tpu.memory_space<vmem>>, vector<1x10x5xf32>
    %148 = vector.shape_cast %147 : vector<1x10x5xf32> to vector<10x5xf32>
    %cst_84 = arith.constant dense<0.000000e+00> : vector<6x5xf32>
    %149 = tpu.matmul %142, %148, %cst_84 {dimension_numbers = #tpu.dot_dimension_numbers<[1], [0], [0], [1], [0, 0, 1, 1], [], []>} : vector<6x10xf32>, vector<10x5xf32>, vector<6x5xf32> -> vector<6x5xf32>
    %c10 = arith.constant 10 : index
    %c0_85 = arith.constant 0 : index
    %c0_86 = arith.constant 0 : index
    %150 = vector.load %arg2[%c10, %c0_85, %c0_86] : memref<12x10x5xf32, #tpu.memory_space<vmem>>, vector<1x10x5xf32>
    %151 = vector.shape_cast %150 : vector<1x10x5xf32> to vector<10x5xf32>
    %cst_87 = arith.constant dense<0.000000e+00> : vector<6x5xf32>
    %152 = tpu.matmul %142, %151, %cst_87 {dimension_numbers = #tpu.dot_dimension_numbers<[1], [0], [0], [1], [0, 0, 1, 1], [], []>} : vector<6x10xf32>, vector<10x5xf32>, vector<6x5xf32> -> vector<6x5xf32>
    "tpu.trace_start"() <{level = 10 : i32, message = "qd,kd->qk"}> : () -> ()
    %cst_88 = arith.constant dense<0.000000e+00> : vector<6x6xf32>
    %153 = tpu.matmul %146, %149, %cst_88 {dimension_numbers = #tpu.dot_dimension_numbers<[1], [1], [0], [0], [0, 0, 1, 0], [], []>} : vector<6x5xf32>, vector<6x5xf32>, vector<6x6xf32> -> vector<6x6xf32>
    "tpu.trace_stop"() : () -> ()
    %154 = arith.addf %153, %1 : vector<6x6xf32>
    %cst_89 = arith.constant dense<0xFF800000> : vector<6xf32>
    %155 = vector.multi_reduction <maximumf>, %154, %cst_89 [1] : vector<6x6xf32> to vector<6xf32>
    %156 = vector.shape_cast %155 : vector<6xf32> to vector<6x1xf32>
    %157 = vector.broadcast %156 : vector<6x1xf32> to vector<6x6xf32>
    %158 = arith.subf %154, %157 : vector<6x6xf32>
    %159 = math.exp %158 : vector<6x6xf32>
    %cst_90 = arith.constant dense<0.000000e+00> : vector<6xf32>
    %160 = vector.multi_reduction <add>, %159, %cst_90 [1] : vector<6x6xf32> to vector<6xf32>
    %161 = vector.shape_cast %160 : vector<6xf32> to vector<6x1xf32>
    %162 = tpu.reciprocal %161 {approx = true} : vector<6x1xf32> -> vector<6x1xf32>
    %163 = vector.broadcast %162 : vector<6x1xf32> to vector<6x6xf32>
    %164 = arith.mulf %159, %163 : vector<6x6xf32>
    %cst_91 = arith.constant dense<0.000000e+00> : vector<6x5xf32>
    %165 = tpu.matmul %164, %152, %cst_91 {dimension_numbers = #tpu.dot_dimension_numbers<[1], [0], [0], [1], [0, 0, 1, 1], [], []>} : vector<6x6xf32>, vector<6x5xf32>, vector<6x5xf32> -> vector<6x5xf32>
    %c2_92 = arith.constant 2 : index
    %c0_93 = arith.constant 0 : index
    %c0_94 = arith.constant 0 : index
    %166 = vector.load %arg3[%c2_92, %c0_93, %c0_94] : memref<4x5x10xf32, #tpu.memory_space<vmem>>, vector<1x5x10xf32>
    %167 = vector.shape_cast %166 : vector<1x5x10xf32> to vector<5x10xf32>
    %cst_95 = arith.constant dense<0.000000e+00> : vector<6x10xf32>
    %168 = tpu.matmul %165, %167, %cst_95 {dimension_numbers = #tpu.dot_dimension_numbers<[1], [0], [0], [1], [0, 0, 1, 1], [], []>} : vector<6x5xf32>, vector<5x10xf32>, vector<6x10xf32> -> vector<6x10xf32>
    %169 = arith.addf %143, %168 : vector<6x10xf32>
    %c7 = arith.constant 7 : index
    %c0_96 = arith.constant 0 : index
    %c0_97 = arith.constant 0 : index
    %170 = vector.load %arg2[%c7, %c0_96, %c0_97] : memref<12x10x5xf32, #tpu.memory_space<vmem>>, vector<1x10x5xf32>
    %171 = vector.shape_cast %170 : vector<1x10x5xf32> to vector<10x5xf32>
    %cst_98 = arith.constant dense<0.000000e+00> : vector<6x5xf32>
    %172 = tpu.matmul %142, %171, %cst_98 {dimension_numbers = #tpu.dot_dimension_numbers<[1], [0], [0], [1], [0, 0, 1, 1], [], []>} : vector<6x10xf32>, vector<10x5xf32>, vector<6x5xf32> -> vector<6x5xf32>
    %c9 = arith.constant 9 : index
    %c0_99 = arith.constant 0 : index
    %c0_100 = arith.constant 0 : index
    %173 = vector.load %arg2[%c9, %c0_99, %c0_100] : memref<12x10x5xf32, #tpu.memory_space<vmem>>, vector<1x10x5xf32>
    %174 = vector.shape_cast %173 : vector<1x10x5xf32> to vector<10x5xf32>
    %cst_101 = arith.constant dense<0.000000e+00> : vector<6x5xf32>
    %175 = tpu.matmul %142, %174, %cst_101 {dimension_numbers = #tpu.dot_dimension_numbers<[1], [0], [0], [1], [0, 0, 1, 1], [], []>} : vector<6x10xf32>, vector<10x5xf32>, vector<6x5xf32> -> vector<6x5xf32>
    %c11 = arith.constant 11 : index
    %c0_102 = arith.constant 0 : index
    %c0_103 = arith.constant 0 : index
    %176 = vector.load %arg2[%c11, %c0_102, %c0_103] : memref<12x10x5xf32, #tpu.memory_space<vmem>>, vector<1x10x5xf32>
    %177 = vector.shape_cast %176 : vector<1x10x5xf32> to vector<10x5xf32>
    %cst_104 = arith.constant dense<0.000000e+00> : vector<6x5xf32>
    %178 = tpu.matmul %142, %177, %cst_104 {dimension_numbers = #tpu.dot_dimension_numbers<[1], [0], [0], [1], [0, 0, 1, 1], [], []>} : vector<6x10xf32>, vector<10x5xf32>, vector<6x5xf32> -> vector<6x5xf32>
    "tpu.trace_start"() <{level = 10 : i32, message = "qd,kd->qk"}> : () -> ()
    %cst_105 = arith.constant dense<0.000000e+00> : vector<6x6xf32>
    %179 = tpu.matmul %172, %175, %cst_105 {dimension_numbers = #tpu.dot_dimension_numbers<[1], [1], [0], [0], [0, 0, 1, 0], [], []>} : vector<6x5xf32>, vector<6x5xf32>, vector<6x6xf32> -> vector<6x6xf32>
    "tpu.trace_stop"() : () -> ()
    %180 = arith.addf %179, %1 : vector<6x6xf32>
    %cst_106 = arith.constant dense<0xFF800000> : vector<6xf32>
    %181 = vector.multi_reduction <maximumf>, %180, %cst_106 [1] : vector<6x6xf32> to vector<6xf32>
    %182 = vector.shape_cast %181 : vector<6xf32> to vector<6x1xf32>
    %183 = vector.broadcast %182 : vector<6x1xf32> to vector<6x6xf32>
    %184 = arith.subf %180, %183 : vector<6x6xf32>
    %185 = math.exp %184 : vector<6x6xf32>
    %cst_107 = arith.constant dense<0.000000e+00> : vector<6xf32>
    %186 = vector.multi_reduction <add>, %185, %cst_107 [1] : vector<6x6xf32> to vector<6xf32>
    %187 = vector.shape_cast %186 : vector<6xf32> to vector<6x1xf32>
    %188 = tpu.reciprocal %187 {approx = true} : vector<6x1xf32> -> vector<6x1xf32>
    %189 = vector.broadcast %188 : vector<6x1xf32> to vector<6x6xf32>
    %190 = arith.mulf %185, %189 : vector<6x6xf32>
    %cst_108 = arith.constant dense<0.000000e+00> : vector<6x5xf32>
    %191 = tpu.matmul %190, %178, %cst_108 {dimension_numbers = #tpu.dot_dimension_numbers<[1], [0], [0], [1], [0, 0, 1, 1], [], []>} : vector<6x6xf32>, vector<6x5xf32>, vector<6x5xf32> -> vector<6x5xf32>
    %c3_109 = arith.constant 3 : index
    %c0_110 = arith.constant 0 : index
    %c0_111 = arith.constant 0 : index
    %192 = vector.load %arg3[%c3_109, %c0_110, %c0_111] : memref<4x5x10xf32, #tpu.memory_space<vmem>>, vector<1x5x10xf32>
    %193 = vector.shape_cast %192 : vector<1x5x10xf32> to vector<5x10xf32>
    %cst_112 = arith.constant dense<0.000000e+00> : vector<6x10xf32>
    %194 = tpu.matmul %191, %193, %cst_112 {dimension_numbers = #tpu.dot_dimension_numbers<[1], [0], [0], [1], [0, 0, 1, 1], [], []>} : vector<6x5xf32>, vector<5x10xf32>, vector<6x10xf32> -> vector<6x10xf32>
    %195 = arith.addf %169, %194 : vector<6x10xf32>
    %196 = arith.addf %118, %195 : vector<6x10xf32>
    %c3_113 = arith.constant 3 : index
    %c0_114 = arith.constant 0 : index
    %197 = vector.load %arg4[%c3_113, %c0_114] : memref<5x10xf32, #tpu.memory_space<vmem>>, vector<1x10xf32>
    %c3_115 = arith.constant 3 : index
    %c0_116 = arith.constant 0 : index
    %198 = vector.load %arg5[%c3_115, %c0_116] : memref<5x10xf32, #tpu.memory_space<vmem>>, vector<1x10xf32>
    %cst_117 = arith.constant dense<0.000000e+00> : vector<6xf32>
    %199 = vector.multi_reduction <add>, %196, %cst_117 [1] : vector<6x10xf32> to vector<6xf32>
    %200 = vector.shape_cast %199 : vector<6xf32> to vector<6x1xf32>
    %cst_118 = arith.constant 1.000000e+01 : f32
    %201 = vector.broadcast %cst_118 : f32 to vector<6x1xf32>
    %202 = arith.divf %200, %201 : vector<6x1xf32>
    %203 = vector.broadcast %202 : vector<6x1xf32> to vector<6x10xf32>
    %204 = arith.subf %196, %203 : vector<6x10xf32>
    %205 = arith.mulf %204, %204 : vector<6x10xf32>
    %cst_119 = arith.constant dense<0.000000e+00> : vector<6xf32>
    %206 = vector.multi_reduction <add>, %205, %cst_119 [1] : vector<6x10xf32> to vector<6xf32>
    %207 = vector.shape_cast %206 : vector<6xf32> to vector<6x1xf32>
    %cst_120 = arith.constant 1.000000e+01 : f32
    %208 = vector.broadcast %cst_120 : f32 to vector<6x1xf32>
    %209 = arith.divf %207, %208 : vector<6x1xf32>
    %210 = vector.broadcast %202 : vector<6x1xf32> to vector<6x10xf32>
    %211 = arith.subf %196, %210 : vector<6x10xf32>
    %cst_121 = arith.constant 9.99999997E-7 : f32
    %212 = vector.broadcast %cst_121 : f32 to vector<6x1xf32>
    %213 = arith.addf %209, %212 : vector<6x1xf32>
    %214 = math.rsqrt %213 : vector<6x1xf32>
    %215 = vector.broadcast %214 : vector<6x1xf32> to vector<6x10xf32>
    %216 = arith.mulf %211, %215 : vector<6x10xf32>
    %217 = vector.broadcast %197 : vector<1x10xf32> to vector<6x10xf32>
    %218 = arith.mulf %216, %217 : vector<6x10xf32>
    %219 = vector.broadcast %198 : vector<1x10xf32> to vector<6x10xf32>
    %220 = arith.addf %218, %219 : vector<6x10xf32>
    %c1_122 = arith.constant 1 : index
    %c0_123 = arith.constant 0 : index
    %c0_124 = arith.constant 0 : index
    %221 = vector.load %arg6[%c1_122, %c0_123, %c0_124] : memref<2x10x24xf32, #tpu.memory_space<vmem>>, vector<1x10x24xf32>
    %222 = vector.shape_cast %221 : vector<1x10x24xf32> to vector<10x24xf32>
    %cst_125 = arith.constant dense<0.000000e+00> : vector<6x24xf32>
    %223 = tpu.matmul %220, %222, %cst_125 {dimension_numbers = #tpu.dot_dimension_numbers<[1], [0], [0], [1], [0, 0, 1, 1], [], []>} : vector<6x10xf32>, vector<10x24xf32>, vector<6x24xf32> -> vector<6x24xf32>
    %c1_126 = arith.constant 1 : index
    %c0_127 = arith.constant 0 : index
    %224 = vector.load %arg7[%c1_126, %c0_127] : memref<2x24xf32, #tpu.memory_space<vmem>>, vector<1x24xf32>
    %225 = vector.broadcast %224 : vector<1x24xf32> to vector<6x24xf32>
    %226 = arith.addf %223, %225 : vector<6x24xf32>
    %cst_128 = arith.constant 0.000000e+00 : f32
    %227 = vector.broadcast %cst_128 : f32 to vector<6x24xf32>
    %228 = arith.maximumf %226, %227 : vector<6x24xf32>
    %c1_129 = arith.constant 1 : index
    %c0_130 = arith.constant 0 : index
    %c0_131 = arith.constant 0 : index
    %229 = vector.load %arg8[%c1_129, %c0_130, %c0_131] : memref<2x24x10xf32, #tpu.memory_space<vmem>>, vector<1x24x10xf32>
    %230 = vector.shape_cast %229 : vector<1x24x10xf32> to vector<24x10xf32>
    %cst_132 = arith.constant dense<0.000000e+00> : vector<6x10xf32>
    %231 = tpu.matmul %228, %230, %cst_132 {dimension_numbers = #tpu.dot_dimension_numbers<[1], [0], [0], [1], [0, 0, 1, 1], [], []>} : vector<6x24xf32>, vector<24x10xf32>, vector<6x10xf32> -> vector<6x10xf32>
    %c1_133 = arith.constant 1 : index
    %c0_134 = arith.constant 0 : index
    %232 = vector.load %arg9[%c1_133, %c0_134] : memref<2x10xf32, #tpu.memory_space<vmem>>, vector<1x10xf32>
    %233 = vector.broadcast %232 : vector<1x10xf32> to vector<6x10xf32>
    %234 = arith.addf %231, %233 : vector<6x10xf32>
    %235 = arith.addf %196, %234 : vector<6x10xf32>
    %c4_135 = arith.constant 4 : index
    %c0_136 = arith.constant 0 : index
    %236 = vector.load %arg4[%c4_135, %c0_136] : memref<5x10xf32, #tpu.memory_space<vmem>>, vector<1x10xf32>
    %c4_137 = arith.constant 4 : index
    %c0_138 = arith.constant 0 : index
    %237 = vector.load %arg5[%c4_137, %c0_138] : memref<5x10xf32, #tpu.memory_space<vmem>>, vector<1x10xf32>
    %cst_139 = arith.constant dense<0.000000e+00> : vector<6xf32>
    %238 = vector.multi_reduction <add>, %235, %cst_139 [1] : vector<6x10xf32> to vector<6xf32>
    %239 = vector.shape_cast %238 : vector<6xf32> to vector<6x1xf32>
    %cst_140 = arith.constant 1.000000e+01 : f32
    %240 = vector.broadcast %cst_140 : f32 to vector<6x1xf32>
    %241 = arith.divf %239, %240 : vector<6x1xf32>
    %242 = vector.broadcast %241 : vector<6x1xf32> to vector<6x10xf32>
    %243 = arith.subf %235, %242 : vector<6x10xf32>
    %244 = arith.mulf %243, %243 : vector<6x10xf32>
    %cst_141 = arith.constant dense<0.000000e+00> : vector<6xf32>
    %245 = vector.multi_reduction <add>, %244, %cst_141 [1] : vector<6x10xf32> to vector<6xf32>
    %246 = vector.shape_cast %245 : vector<6xf32> to vector<6x1xf32>
    %cst_142 = arith.constant 1.000000e+01 : f32
    %247 = vector.broadcast %cst_142 : f32 to vector<6x1xf32>
    %248 = arith.divf %246, %247 : vector<6x1xf32>
    %249 = vector.broadcast %241 : vector<6x1xf32> to vector<6x10xf32>
    %250 = arith.subf %235, %249 : vector<6x10xf32>
    %cst_143 = arith.constant 9.99999997E-7 : f32
    %251 = vector.broadcast %cst_143 : f32 to vector<6x1xf32>
    %252 = arith.addf %248, %251 : vector<6x1xf32>
    %253 = math.rsqrt %252 : vector<6x1xf32>
    %254 = vector.broadcast %253 : vector<6x1xf32> to vector<6x10xf32>
    %255 = arith.mulf %250, %254 : vector<6x10xf32>
    %256 = vector.broadcast %236 : vector<1x10xf32> to vector<6x10xf32>
    %257 = arith.mulf %255, %256 : vector<6x10xf32>
    %258 = vector.broadcast %237 : vector<1x10xf32> to vector<6x10xf32>
    %259 = arith.addf %257, %258 : vector<6x10xf32>
    %c0_144 = arith.constant 0 : index
    %c0_145 = arith.constant 0 : index
    %260 = vector.load %arg10[%c0_144, %c0_145] : memref<10x10xf32, #tpu.memory_space<vmem>>, vector<10x10xf32>
    %cst_146 = arith.constant dense<0.000000e+00> : vector<6x10xf32>
    %261 = tpu.matmul %259, %260, %cst_146 {dimension_numbers = #tpu.dot_dimension_numbers<[1], [0], [0], [1], [0, 0, 1, 1], [], []>} : vector<6x10xf32>, vector<10x10xf32>, vector<6x10xf32> -> vector<6x10xf32>
    %c0_147 = arith.constant 0 : index
    %c0_148 = arith.constant 0 : index
    %262 = vector.load %arg11[%c0_147, %c0_148] : memref<1x10xf32, #tpu.memory_space<vmem>>, vector<1x10xf32>
    %263 = vector.broadcast %262 : vector<1x10xf32> to vector<6x10xf32>
    %264 = arith.addf %261, %263 : vector<6x10xf32>
    %c0_149 = arith.constant 0 : index
    %c0_150 = arith.constant 0 : index
    %265 = vector.load %arg12[%c0_149, %c0_150] : memref<6x10xf32, #tpu.memory_space<vmem>>, vector<6x10xf32>
    tpu.vector_store %arg12[%c0_149, %c0_150], %264 {strides = array<i32>} : memref<6x10xf32, #tpu.memory_space<vmem>>, vector<6x10xf32>,
    return
  }
}

</mosaic_0001>

<llo_original>
// kernel: tpu_custom_call.1
$region0: #{tpu_custom_call.1}
  #allocation0 [shape = 'u32[]', space=smem, size = 0x4, offset = 0x4, fixed_abs, tag = 'smem constant byte address 0x4 - core index']
  #allocation1 [shape = 'u32[144,128]{1,0:T(1,128)}', space=vmem, size = 0x12000, scoped, tag = 'internal scratch']
  %s0 = inlined_call_operand.vmem [shape: f32[6,10], index: 0, kind: input, shape index: {}]
  %s1 = inlined_call_operand.vmem [shape: f32[6,6], index: 1, kind: input, shape index: {}]
  %s2 = inlined_call_operand.vmem [shape: f32[12,10,5], index: 2, kind: input, shape index: {}]
  %s3 = inlined_call_operand.vmem [shape: f32[4,5,10], index: 3, kind: input, shape index: {}]
  %s4 = inlined_call_operand.vmem [shape: f32[5,10], index: 4, kind: input, shape index: {}]
  %s5 = inlined_call_operand.vmem [shape: f32[5,10], index: 5, kind: input, shape index: {}]
  %s6 = inlined_call_operand.vmem [shape: f32[2,10,24], index: 6, kind: input, shape index: {}]
  %s7 = inlined_call_operand.vmem [shape: f32[2,24], index: 7, kind: input, shape index: {}]
  %s8 = inlined_call_operand.vmem [shape: f32[2,24,10], index: 8, kind: input, shape index: {}]
  %s9 = inlined_call_operand.vmem [shape: f32[2,10], index: 9, kind: input, shape index: {}]
  %s10 = inlined_call_operand.vmem [shape: f32[10,10], index: 10, kind: input, shape index: {}]
  %s11 = inlined_call_operand.vmem [shape: f32[1,10], index: 11, kind: input, shape index: {}]
  %s12 = inlined_call_operand.hbm [shape: f32[6,10], index: 12, kind: output, shape index: {}]
  %s13 = sld [smem:[#allocation0]]
  $region58: #{tpu_custom_call.1} parent=0
    _
  %s15 = ssub.s32 1, %s13
  %s16 = scalar_select 0, %s15, %s13
  $region1: #{tpu_custom_call.1} parent=0
    #allocation2 [shape = 'u8[4096]{0}', space=vmem, size = 0x1000, scoped, tag = 'output window, operand 0, single buffered']
    #allocation3 [shape = 's32[1]{0}', space=sflag, size = 0x4, scoped, tag = 'scoped memory for tpu_custom_call.1']
    %17 = vsyncpa [#allocation3], 0
    // Predicated region
    $region2: #{tpu_custom_call.1} parent=1 // pred_check
      _
    $region3: #{tpu_custom_call.1} parent=1 // pred_check_branch
      %19 = sbr.rel (0) target = $region5
    $region4: #{tpu_custom_call.1} parent=1 // pred_region
      _
    $region5: #{tpu_custom_call.1} parent=1 // pred_fallthru
      _
    // Predicated region
    $region6: #{tpu_custom_call.1} parent=1 // pred_check
      _
    $region7: #{tpu_custom_call.1} parent=1 // pred_check_branch
      %21 = sbr.rel (0) target = $region9
    $region8: #{tpu_custom_call.1} parent=1 // pred_region
      _
    $region9: #{tpu_custom_call.1} parent=1 // pred_fallthru
      _
    // Predicated region
    $region10: #{tpu_custom_call.1} parent=1 // pred_check
      _
    $region11: #{tpu_custom_call.1} parent=1 // pred_check_branch
      %23 = sbr.rel (0) target = $region13
    $region12: #{tpu_custom_call.1} parent=1 // pred_region
      _
    $region13: #{tpu_custom_call.1} parent=1 // pred_fallthru
      _
    // Predicated region
    $region14: #{tpu_custom_call.1} parent=1 // pred_check
      _
    $region15: #{tpu_custom_call.1} parent=1 // pred_check_branch
      %25 = sbr.rel (0) target = $region17
    $region16: #{tpu_custom_call.1} parent=1 // pred_region
      _
    $region17: #{tpu_custom_call.1} parent=1 // pred_fallthru
      _
    // Predicated region
    $region18: #{tpu_custom_call.1} parent=1 // pred_check
      _
    $region19: #{tpu_custom_call.1} parent=1 // pred_check_branch
      %27 = sbr.rel (0) target = $region21
    $region20: #{tpu_custom_call.1} parent=1 // pred_region
      _
    $region21: #{tpu_custom_call.1} parent=1 // pred_fallthru
      _
    // Predicated region
    $region22: #{tpu_custom_call.1} parent=1 // pred_check
      _
    $region23: #{tpu_custom_call.1} parent=1 // pred_check_branch
      %29 = sbr.rel (0) target = $region25
    $region24: #{tpu_custom_call.1} parent=1 // pred_region
      _
    $region25: #{tpu_custom_call.1} parent=1 // pred_fallthru
      _
    // Predicated region
    $region26: #{tpu_custom_call.1} parent=1 // pred_check
      _
    $region27: #{tpu_custom_call.1} parent=1 // pred_check_branch
      %31 = sbr.rel (0) target = $region29
    $region28: #{tpu_custom_call.1} parent=1 // pred_region
      _
    $region29: #{tpu_custom_call.1} parent=1 // pred_fallthru
      _
    // Predicated region
    $region30: #{tpu_custom_call.1} parent=1 // pred_check
      _
    $region31: #{tpu_custom_call.1} parent=1 // pred_check_branch
      %33 = sbr.rel (0) target = $region33
    $region32: #{tpu_custom_call.1} parent=1 // pred_region
      _
    $region33: #{tpu_custom_call.1} parent=1 // pred_fallthru
      _
    // Predicated region
    $region34: #{tpu_custom_call.1} parent=1 // pred_check
      _
    $region35: #{tpu_custom_call.1} parent=1 // pred_check_branch
      %35 = sbr.rel (0) target = $region37
    $region36: #{tpu_custom_call.1} parent=1 // pred_region
      _
    $region37: #{tpu_custom_call.1} parent=1 // pred_fallthru
      _
    // Predicated region
    $region38: #{tpu_custom_call.1} parent=1 // pred_check
      _
    $region39: #{tpu_custom_call.1} parent=1 // pred_check_branch
      %37 = sbr.rel (0) target = $region41
    $region40: #{tpu_custom_call.1} parent=1 // pred_region
      _
    $region41: #{tpu_custom_call.1} parent=1 // pred_fallthru
      _
    // Predicated region
    $region42: #{tpu_custom_call.1} parent=1 // pred_check
      _
    $region43: #{tpu_custom_call.1} parent=1 // pred_check_branch
      %39 = sbr.rel (0) target = $region45
    $region44: #{tpu_custom_call.1} parent=1 // pred_region
      _
    $region45: #{tpu_custom_call.1} parent=1 // pred_fallthru
      _
    // Predicated region
    $region46: #{tpu_custom_call.1} parent=1 // pred_check
      _
    $region47: #{tpu_custom_call.1} parent=1 // pred_check_branch
      %41 = sbr.rel (0) target = $region49
    $region48: #{tpu_custom_call.1} parent=1 // pred_region
      _
    $region49: #{tpu_custom_call.1} parent=1 // pred_fallthru
      _
    %v42 = vld [vmem:[%s0] sm:$0x3f]
    %v43 = vld [vmem:[%s1] sm:$0x3f]
    %v44 = vld [vmem:[%s4] sm:$0x1]
    %v45 = vld [vmem:[%s5] sm:$0x1]
    %vm46 = vcmask 78848
    %v47 = vsel %vm46, %v42, 0.0
    %48 = vadd.xlane.f32.xlu0 %v47
    %v49 = vpop.xlane.xlu0 %48
    %v50 = vrcp.pop 10.0
    %v51 = vmul.f32 %v49, %v50
    %v52 = vsub.f32 %v42, %v51
    %v53 = vmul.f32 %v52, %v52
    %v54 = vsel %vm46, %v53, 0.0
    %55 = vadd.xlane.f32.xlu0 %v54
    %v56 = vpop.xlane.xlu0 %55
    %v57 = vmul.f32 %v56, %v50
    %v58 = vadd.f32 %v57, 1e-06
    %v59 = vrsqrt.pop %v58
    %v60 = vmul.f32 %v52, %v59
    %v61 = vlaneseq
    %v62 = vshrl.u32 %v61, 7
    %v63 = vsub.s32 0, %v62
    %v64 = vrot.slane %v44, %v63
    %v65 = vmul.f32 %v60, %v64
    %v66 = vlaneseq
    %v67 = vshrl.u32 %v66, 7
    %v68 = vsub.s32 0, %v67
    %v69 = vrot.slane %v45, %v68
    %v70 = vadd.f32 %v65, %v69
    %v71 = vld [vmem:[%s2] sm:$0xff]
    %v72 = vld [vmem:[%s2 + $0x8] sm:$0x3]
    %vm73 = vcmask 80896
    %v75 = vsel %vm73, %v70, 0
    %vm77 = vcmask 1041408
    %v79 = vsel %vm77, %v72, 0
    %81 = vmatprep.subr.mxu0 0.0
    %82 = vmatpush1.msra.mxu0 %v71
    %83 = vmatprep.subr.mxu0 0.0
    %84 = vmatpush1.msra.mxu0 %v79
    %85 = vmatprep.subr.mxu0 0.0
    %86 = vmatpush1.msra.mxu0 0.0
    %87 = vmatprep.subr.mxu0 0.0
    %88 = vmatpush1.msra.mxu0 0.0
    %89 = vmatprep.subr.mxu0 0.0
    %90 = vmatpush1.msra.mxu0 0.0
    %91 = vmatprep.subr.mxu0 0.0
    %92 = vmatpush1.msra.mxu0 0.0
    %93 = vmatprep.subr.mxu0 0.0
    %94 = vmatpush1.msra.mxu0 0.0
    %95 = vmatprep.subr.mxu0 0.0
    %96 = vmatpush1.msra.mxu0 0.0
    %97 = vmatprep.subr.mxu0 0.0
    %98 = vmatpush1.msra.mxu0 0.0
    %99 = vmatprep.subr.mxu0 0.0
    %100 = vmatpush1.msra.mxu0 0.0
    %101 = vmatprep.subr.mxu0 0.0
    %102 = vmatpush1.msra.mxu0 0.0
    %103 = vmatprep.subr.mxu0 0.0
    %104 = vmatpush1.msra.mxu0 0.0
    %105 = vmatprep.subr.mxu0 0.0
    %106 = vmatpush1.msra.mxu0 0.0
    %107 = vmatprep.subr.mxu0 0.0
    %108 = vmatpush1.msra.mxu0 0.0
    %109 = vmatprep.subr.mxu0 0.0
    %110 = vmatpush1.msra.mxu0 0.0
    %111 = vmatprep.subr.mxu0 0.0
    %112 = vmatpush1.msra.mxu0 0.0
    %113 = vmatprep.subr.mxu0 0.0
    %114 = vmatpush1.msra.mxu0 0.0
    %115 = vmatprep.subr.mxu0 0.0
    %116 = vmatpush1.msra.mxu0 0.0
    %117 = vmatprep.subr.mxu0 0.0
    %118 = vmatpush1.msra.mxu0 0.0
    %119 = vmatprep.subr.mxu0 0.0
    %120 = vmatpush1.msra.mxu0 0.0
    %121 = vmatprep.subr.mxu0 0.0
    %122 = vmatpush1.msra.mxu0 0.0
    %123 = vmatprep.subr.mxu0 0.0
    %124 = vmatpush1.msra.mxu0 0.0
    %125 = vmatprep.subr.mxu0 0.0
    %126 = vmatpush1.msra.mxu0 0.0
    %127 = vmatprep.subr.mxu0 0.0
    %128 = vmatpush1.msra.mxu0 0.0
    %129 = vmatprep.subr.mxu0 0.0
    %130 = vmatpush1.msra.mxu0 0.0
    %131 = vmatprep.subr.mxu0 0.0
    %132 = vmatpush1.msra.mxu0 0.0
    %133 = vmatprep.subr.mxu0 0.0
    %134 = vmatpush1.msra.mxu0 0.0
    %135 = vmatprep.subr.mxu0 0.0
    %136 = vmatpush1.msra.mxu0 0.0
    %137 = vmatprep.subr.mxu0 0.0
    %138 = vmatpush1.msra.mxu0 0.0
    %139 = vmatprep.subr.mxu0 0.0
    %140 = vmatpush1.msra.mxu0 0.0
    %141 = vmatprep.subr.mxu0 0.0
    %142 = vmatpush1.msra.mxu0 0.0
    %143 = vmatprep.subr.mxu0 0.0
    %144 = vmatpush1.msra.mxu0 0.0
    %145 = vmatprep.mubr.f32.mxu0 0.0
    %146 = vmatmul.mubr.f32.gmra.mrb[0].mxu0 %v75
    %v147 = vpop.f32.mrb[0].mxu0
    %v148 = vadd.f32 0.0, %v147
    %v149 = vpop.f32.mrb[0].mxu0
    %150 = vdwg.mxu0
    %s151 = scalar_lea.vmem %s2, 32
    %v152 = vld [vmem:[%s151] sm:$0xff]
    %v153 = vld [vmem:[%s151 + $0x8] sm:$0x3]
    %v155 = vsel %vm77, %v153, 0
    %157 = vmatprep.subr.mxu0 0.0
    %158 = vmatpush1.msra.mxu0 %v152
    %159 = vmatprep.subr.mxu0 0.0
    %160 = vmatpush1.msra.mxu0 %v155
    %161 = vmatprep.subr.mxu0 0.0
    %162 = vmatpush1.msra.mxu0 0.0
    %163 = vmatprep.subr.mxu0 0.0
    %164 = vmatpush1.msra.mxu0 0.0
    %165 = vmatprep.subr.mxu0 0.0
    %166 = vmatpush1.msra.mxu0 0.0
    %167 = vmatprep.subr.mxu0 0.0
    %168 = vmatpush1.msra.mxu0 0.0
    %169 = vmatprep.subr.mxu0 0.0
    %170 = vmatpush1.msra.mxu0 0.0
    %171 = vmatprep.subr.mxu0 0.0
    %172 = vmatpush1.msra.mxu0 0.0
    %173 = vmatprep.subr.mxu0 0.0
    %174 = vmatpush1.msra.mxu0 0.0
    %175 = vmatprep.subr.mxu0 0.0
    %176 = vmatpush1.msra.mxu0 0.0
    %177 = vmatprep.subr.mxu0 0.0
    %178 = vmatpush1.msra.mxu0 0.0
    %179 = vmatprep.subr.mxu0 0.0
    %180 = vmatpush1.msra.mxu0 0.0
    %181 = vmatprep.subr.mxu0 0.0
    %182 = vmatpush1.msra.mxu0 0.0
    %183 = vmatprep.subr.mxu0 0.0
    %184 = vmatpush1.msra.mxu0 0.0
    %185 = vmatprep.subr.mxu0 0.0
    %186 = vmatpush1.msra.mxu0 0.0
    %187 = vmatprep.subr.mxu0 0.0
    %188 = vmatpush1.msra.mxu0 0.0
    %189 = vmatprep.subr.mxu0 0.0
    %190 = vmatpush1.msra.mxu0 0.0
    %191 = vmatprep.subr.mxu0 0.0
    %192 = vmatpush1.msra.mxu0 0.0
    %193 = vmatprep.subr.mxu0 0.0
    %194 = vmatpush1.msra.mxu0 0.0
    %195 = vmatprep.subr.mxu0 0.0
    %196 = vmatpush1.msra.mxu0 0.0
    %197 = vmatprep.subr.mxu0 0.0
    %198 = vmatpush1.msra.mxu0 0.0
    %199 = vmatprep.subr.mxu0 0.0
    %200 = vmatpush1.msra.mxu0 0.0
    %201 = vmatprep.subr.mxu0 0.0
    %202 = vmatpush1.msra.mxu0 0.0
    %203 = vmatprep.subr.mxu0 0.0
    %204 = vmatpush1.msra.mxu0 0.0
    %205 = vmatprep.subr.mxu0 0.0
    %206 = vmatpush1.msra.mxu0 0.0
    %207 = vmatprep.subr.mxu0 0.0
    %208 = vmatpush1.msra.mxu0 0.0
    %209 = vmatprep.subr.mxu0 0.0
    %210 = vmatpush1.msra.mxu0 0.0
    %211 = vmatprep.subr.mxu0 0.0
    %212 = vmatpush1.msra.mxu0 0.0
    %213 = vmatprep.subr.mxu0 0.0
    %214 = vmatpush1.msra.mxu0 0.0
    %215 = vmatprep.subr.mxu0 0.0
    %216 = vmatpush1.msra.mxu0 0.0
    %217 = vmatprep.subr.mxu0 0.0
    %218 = vmatpush1.msra.mxu0 0.0
    %219 = vmatprep.subr.mxu0 0.0
    %220 = vmatpush1.msra.mxu0 0.0
    %221 = vmatprep.mubr.f32.mxu0 0.0
    %222 = vmatmul.mubr.f32.gmra.mrb[0].mxu0 %v75
    %v223 = vpop.f32.mrb[0].mxu0
    %v224 = vadd.f32 0.0, %v223
    %v225 = vpop.f32.mrb[0].mxu0
    %226 = vdwg.mxu0
    %s227 = scalar_lea.vmem %s2, 64
    %v228 = vld [vmem:[%s227] sm:$0xff]
    %v229 = vld [vmem:[%s227 + $0x8] sm:$0x3]
    %v231 = vsel %vm77, %v229, 0
    %233 = vmatprep.subr.mxu0 0.0
    %234 = vmatpush1.msra.mxu0 %v228
    %235 = vmatprep.subr.mxu0 0.0
    %236 = vmatpush1.msra.mxu0 %v231
    %237 = vmatprep.subr.mxu0 0.0
    %238 = vmatpush1.msra.mxu0 0.0
    %239 = vmatprep.subr.mxu0 0.0
    %240 = vmatpush1.msra.mxu0 0.0
    %241 = vmatprep.subr.mxu0 0.0
    %242 = vmatpush1.msra.mxu0 0.0
    %243 = vmatprep.subr.mxu0 0.0
    %244 = vmatpush1.msra.mxu0 0.0
    %245 = vmatprep.subr.mxu0 0.0
    %246 = vmatpush1.msra.mxu0 0.0
    %247 = vmatprep.subr.mxu0 0.0
    %248 = vmatpush1.msra.mxu0 0.0
    %249 = vmatprep.subr.mxu0 0.0
    %250 = vmatpush1.msra.mxu0 0.0
    %251 = vmatprep.subr.mxu0 0.0
    %252 = vmatpush1.msra.mxu0 0.0
    %253 = vmatprep.subr.mxu0 0.0
    %254 = vmatpush1.msra.mxu0 0.0
    %255 = vmatprep.subr.mxu0 0.0
    %256 = vmatpush1.msra.mxu0 0.0
    %257 = vmatprep.subr.mxu0 0.0
    %258 = vmatpush1.msra.mxu0 0.0
    %259 = vmatprep.subr.mxu0 0.0
    %260 = vmatpush1.msra.mxu0 0.0
    %261 = vmatprep.subr.mxu0 0.0
    %262 = vmatpush1.msra.mxu0 0.0
    %263 = vmatprep.subr.mxu0 0.0
    %264 = vmatpush1.msra.mxu0 0.0
    %265 = vmatprep.subr.mxu0 0.0
    %266 = vmatpush1.msra.mxu0 0.0
    %267 = vmatprep.subr.mxu0 0.0
    %268 = vmatpush1.msra.mxu0 0.0
    %269 = vmatprep.subr.mxu0 0.0
    %270 = vmatpush1.msra.mxu0 0.0
    %271 = vmatprep.subr.mxu0 0.0
    %272 = vmatpush1.msra.mxu0 0.0
    %273 = vmatprep.subr.mxu0 0.0
    %274 = vmatpush1.msra.mxu0 0.0
    %275 = vmatprep.subr.mxu0 0.0
    %276 = vmatpush1.msra.mxu0 0.0
    %277 = vmatprep.subr.mxu0 0.0
    %278 = vmatpush1.msra.mxu0 0.0
    %279 = vmatprep.subr.mxu0 0.0
    %280 = vmatpush1.msra.mxu0 0.0
    %281 = vmatprep.subr.mxu0 0.0
    %282 = vmatpush1.msra.mxu0 0.0
    %283 = vmatprep.subr.mxu0 0.0
    %284 = vmatpush1.msra.mxu0 0.0
    %285 = vmatprep.subr.mxu0 0.0
    %286 = vmatpush1.msra.mxu0 0.0
    %287 = vmatprep.subr.mxu0 0.0
    %288 = vmatpush1.msra.mxu0 0.0
    %289 = vmatprep.subr.mxu0 0.0
    %290 = vmatpush1.msra.mxu0 0.0
    %291 = vmatprep.subr.mxu0 0.0
    %292 = vmatpush1.msra.mxu0 0.0
    %293 = vmatprep.subr.mxu0 0.0
    %294 = vmatpush1.msra.mxu0 0.0
    %295 = vmatprep.subr.mxu0 0.0
    %296 = vmatpush1.msra.mxu0 0.0
    %297 = vmatprep.mubr.f32.mxu0 0.0
    %298 = vmatmul.mubr.f32.gmra.mrb[0].mxu0 %v75
    %v299 = vpop.f32.mrb[0].mxu0
    %v300 = vadd.f32 0.0, %v299
    %v301 = vpop.f32.mrb[0].mxu0
    %302 = vdwg.mxu0
    %vm303 = vcmask 39936
    %v305 = vsel %vm303, %v148, 0
    %v308 = vsel %vm303, %v224, 0
    %310 = vmatprep.subr.mxu0 0.0
    %311 = vmatpush1.xpose.msra.mxu0 %v308
    %312 = vmatprep.subr.mxu0 0.0
    %313 = vmatpush1.xpose.msra.mxu0 0.0
    %314 = vmatprep.subr.mxu0 0.0
    %315 = vmatpush1.xpose.msra.mxu0 0.0
    %316 = vmatprep.subr.mxu0 0.0
    %317 = vmatpush1.xpose.msra.mxu0 0.0
    %318 = vmatprep.subr.mxu0 0.0
    %319 = vmatpush1.xpose.msra.mxu0 0.0
    %320 = vmatprep.subr.mxu0 0.0
    %321 = vmatpush1.xpose.msra.mxu0 0.0
    %322 = vmatprep.subr.mxu0 0.0
    %323 = vmatpush1.xpose.msra.mxu0 0.0
    %324 = vmatprep.subr.mxu0 0.0
    %325 = vmatpush1.xpose.msra.mxu0 0.0
    %326 = vmatprep.subr.mxu0 0.0
    %327 = vmatpush1.xpose.msra.mxu0 0.0
    %328 = vmatprep.subr.mxu0 0.0
    %329 = vmatpush1.xpose.msra.mxu0 0.0
    %330 = vmatprep.subr.mxu0 0.0
    %331 = vmatpush1.xpose.msra.mxu0 0.0
    %332 = vmatprep.subr.mxu0 0.0
    %333 = vmatpush1.xpose.msra.mxu0 0.0
    %334 = vmatprep.subr.mxu0 0.0
    %335 = vmatpush1.xpose.msra.mxu0 0.0
    %336 = vmatprep.subr.mxu0 0.0
    %337 = vmatpush1.xpose.msra.mxu0 0.0
    %338 = vmatprep.subr.mxu0 0.0
    %339 = vmatpush1.xpose.msra.mxu0 0.0
    %340 = vmatprep.subr.mxu0 0.0
    %341 = vmatpush1.xpose.msra.mxu0 0.0
    %342 = vmatprep.subr.mxu0 0.0
    %343 = vmatpush1.xpose.msra.mxu0 0.0
    %344 = vmatprep.subr.mxu0 0.0
    %345 = vmatpush1.xpose.msra.mxu0 0.0
    %346 = vmatprep.subr.mxu0 0.0
    %347 = vmatpush1.xpose.msra.mxu0 0.0
    %348 = vmatprep.subr.mxu0 0.0
    %349 = vmatpush1.xpose.msra.mxu0 0.0
    %350 = vmatprep.subr.mxu0 0.0
    %351 = vmatpush1.xpose.msra.mxu0 0.0
    %352 = vmatprep.subr.mxu0 0.0
    %353 = vmatpush1.xpose.msra.mxu0 0.0
    %354 = vmatprep.subr.mxu0 0.0
    %355 = vmatpush1.xpose.msra.mxu0 0.0
    %356 = vmatprep.subr.mxu0 0.0
    %357 = vmatpush1.xpose.msra.mxu0 0.0
    %358 = vmatprep.subr.mxu0 0.0
    %359 = vmatpush1.xpose.msra.mxu0 0.0
    %360 = vmatprep.subr.mxu0 0.0
    %361 = vmatpush1.xpose.msra.mxu0 0.0
    %362 = vmatprep.subr.mxu0 0.0
    %363 = vmatpush1.xpose.msra.mxu0 0.0
    %364 = vmatprep.subr.mxu0 0.0
    %365 = vmatpush1.xpose.msra.mxu0 0.0
    %366 = vmatprep.subr.mxu0 0.0
    %367 = vmatpush1.xpose.msra.mxu0 0.0
    %368 = vmatprep.subr.mxu0 0.0
    %369 = vmatpush1.xpose.msra.mxu0 0.0
    %370 = vmatprep.subr.mxu0 0.0
    %371 = vmatpush1.xpose.msra.mxu0 0.0
    %372 = vmatprep.subr.mxu0 0.0
    %373 = vmatpush1.xpose.msra.mxu0 0.0
    %374 = vmatprep.mubr.f32.mxu0 0.0
    %375 = vmatmul.mubr.f32.gmra.mrb[0].mxu0 %v305
    %v376 = vpop.f32.mrb[0].mxu0
    %v377 = vadd.f32 %v43, %v376
    %v378 = vpop.f32.mrb[0].mxu0
    %379 = vdwg.mxu0
    %vm380 = vcmask 46080
    %v381 = vsel %vm380, %v377, -inf
    %382 = vmax.xlane.f32.xlu0 %v381
    %v383 = vpop.xlane.xlu0 %382
    %v384 = vsub.f32 %v377, %v383
    %v385 = vmul.f32 %v384, 1.442695
    %v386 = vpow.pop %v385
    %v387 = vsel %vm380, %v386, 0.0
    %388 = vadd.xlane.f32.xlu0 %v387
    %v389 = vpop.xlane.xlu0 %388
    %v390 = vrcp.pop %v389
    %v391 = vmul.f32 %v386, %v390
    %vm392 = vcmask 48128
    %v394 = vsel %vm392, %v391, 0
    %vm396 = vcmask 1045504
    %v398 = vsel %vm396, %v300, 0
    %400 = vmatprep.subr.mxu0 0.0
    %401 = vmatpush1.msra.mxu0 %v398
    %402 = vmatprep.subr.mxu0 0.0
    %403 = vmatpush1.msra.mxu0 0.0
    %404 = vmatprep.subr.mxu0 0.0
    %405 = vmatpush1.msra.mxu0 0.0
    %406 = vmatprep.subr.mxu0 0.0
    %407 = vmatpush1.msra.mxu0 0.0
    %408 = vmatprep.subr.mxu0 0.0
    %409 = vmatpush1.msra.mxu0 0.0
    %410 = vmatprep.subr.mxu0 0.0
    %411 = vmatpush1.msra.mxu0 0.0
    %412 = vmatprep.subr.mxu0 0.0
    %413 = vmatpush1.msra.mxu0 0.0
    %414 = vmatprep.subr.mxu0 0.0
    %415 = vmatpush1.msra.mxu0 0.0
    %416 = vmatprep.subr.mxu0 0.0
    %417 = vmatpush1.msra.mxu0 0.0
    %418 = vmatprep.subr.mxu0 0.0
    %419 = vmatpush1.msra.mxu0 0.0
    %420 = vmatprep.subr.mxu0 0.0
    %421 = vmatpush1.msra.mxu0 0.0
    %422 = vmatprep.subr.mxu0 0.0
    %423 = vmatpush1.msra.mxu0 0.0
    %424 = vmatprep.subr.mxu0 0.0
    %425 = vmatpush1.msra.mxu0 0.0
    %426 = vmatprep.subr.mxu0 0.0
    %427 = vmatpush1.msra.mxu0 0.0
    %428 = vmatprep.subr.mxu0 0.0
    %429 = vmatpush1.msra.mxu0 0.0
    %430 = vmatprep.subr.mxu0 0.0
    %431 = vmatpush1.msra.mxu0 0.0
    %432 = vmatprep.subr.mxu0 0.0
    %433 = vmatpush1.msra.mxu0 0.0
    %434 = vmatprep.subr.mxu0 0.0
    %435 = vmatpush1.msra.mxu0 0.0
    %436 = vmatprep.subr.mxu0 0.0
    %437 = vmatpush1.msra.mxu0 0.0
    %438 = vmatprep.subr.mxu0 0.0
    %439 = vmatpush1.msra.mxu0 0.0
    %440 = vmatprep.subr.mxu0 0.0
    %441 = vmatpush1.msra.mxu0 0.0
    %442 = vmatprep.subr.mxu0 0.0
    %443 = vmatpush1.msra.mxu0 0.0
    %444 = vmatprep.subr.mxu0 0.0
    %445 = vmatpush1.msra.mxu0 0.0
    %446 = vmatprep.subr.mxu0 0.0
    %447 = vmatpush1.msra.mxu0 0.0
    %448 = vmatprep.subr.mxu0 0.0
    %449 = vmatpush1.msra.mxu0 0.0
    %450 = vmatprep.subr.mxu0 0.0
    %451 = vmatpush1.msra.mxu0 0.0
    %452 = vmatprep.subr.mxu0 0.0
    %453 = vmatpush1.msra.mxu0 0.0
    %454 = vmatprep.subr.mxu0 0.0
    %455 = vmatpush1.msra.mxu0 0.0
    %456 = vmatprep.subr.mxu0 0.0
    %457 = vmatpush1.msra.mxu0 0.0
    %458 = vmatprep.subr.mxu0 0.0
    %459 = vmatpush1.msra.mxu0 0.0
    %460 = vmatprep.subr.mxu0 0.0
    %461 = vmatpush1.msra.mxu0 0.0
    %462 = vmatprep.subr.mxu0 0.0
    %463 = vmatpush1.msra.mxu0 0.0
    %464 = vmatprep.mubr.f32.mxu0 0.0
    %465 = vmatmul.mubr.f32.gmra.mrb[0].mxu0 %v394
    %v466 = vpop.f32.mrb[0].mxu0
    %v467 = vadd.f32 0.0, %v466
    %v468 = vpop.f32.mrb[0].mxu0
    %469 = vdwg.mxu0
    %v470 = vld [vmem:[%s3] sm:$0x1f]
    %s471 = scalar_lea.vmem %s2, 16
    %v472 = vld [vmem:[%s471] sm:$0xff]
    %v473 = vld [vmem:[%s471 + $0x8] sm:$0x3]
    %v475 = vsel %vm77, %v473, 0
    %477 = vmatprep.subr.mxu0 0.0
    %478 = vmatpush1.msra.mxu0 %v472
    %479 = vmatprep.subr.mxu0 0.0
    %480 = vmatpush1.msra.mxu0 %v475
    %481 = vmatprep.subr.mxu0 0.0
    %482 = vmatpush1.msra.mxu0 0.0
    %483 = vmatprep.subr.mxu0 0.0
    %484 = vmatpush1.msra.mxu0 0.0
    %485 = vmatprep.subr.mxu0 0.0
    %486 = vmatpush1.msra.mxu0 0.0
    %487 = vmatprep.subr.mxu0 0.0
    %488 = vmatpush1.msra.mxu0 0.0
    %489 = vmatprep.subr.mxu0 0.0
    %490 = vmatpush1.msra.mxu0 0.0
    %491 = vmatprep.subr.mxu0 0.0
    %492 = vmatpush1.msra.mxu0 0.0
    %493 = vmatprep.subr.mxu0 0.0
    %494 = vmatpush1.msra.mxu0 0.0
    %495 = vmatprep.subr.mxu0 0.0
    %496 = vmatpush1.msra.mxu0 0.0
    %497 = vmatprep.subr.mxu0 0.0
    %498 = vmatpush1.msra.mxu0 0.0
    %499 = vmatprep.subr.mxu0 0.0
    %500 = vmatpush1.msra.mxu0 0.0
    %501 = vmatprep.subr.mxu0 0.0
    %502 = vmatpush1.msra.mxu0 0.0
    %503 = vmatprep.subr.mxu0 0.0
    %504 = vmatpush1.msra.mxu0 0.0
    %505 = vmatprep.subr.mxu0 0.0
    %506 = vmatpush1.msra.mxu0 0.0
    %507 = vmatprep.subr.mxu0 0.0
    %508 = vmatpush1.msra.mxu0 0.0
    %509 = vmatprep.subr.mxu0 0.0
    %510 = vmatpush1.msra.mxu0 0.0
    %511 = vmatprep.subr.mxu0 0.0
    %512 = vmatpush1.msra.mxu0 0.0
    %513 = vmatprep.subr.mxu0 0.0
    %514 = vmatpush1.msra.mxu0 0.0
    %515 = vmatprep.subr.mxu0 0.0
    %516 = vmatpush1.msra.mxu0 0.0
    %517 = vmatprep.subr.mxu0 0.0
    %518 = vmatpush1.msra.mxu0 0.0
    %519 = vmatprep.subr.mxu0 0.0
    %520 = vmatpush1.msra.mxu0 0.0
    %521 = vmatprep.subr.mxu0 0.0
    %522 = vmatpush1.msra.mxu0 0.0
    %523 = vmatprep.subr.mxu0 0.0
    %524 = vmatpush1.msra.mxu0 0.0
    %525 = vmatprep.subr.mxu0 0.0
    %526 = vmatpush1.msra.mxu0 0.0
    %527 = vmatprep.subr.mxu0 0.0
    %528 = vmatpush1.msra.mxu0 0.0
    %529 = vmatprep.subr.mxu0 0.0
    %530 = vmatpush1.msra.mxu0 0.0
    %531 = vmatprep.subr.mxu0 0.0
    %532 = vmatpush1.msra.mxu0 0.0
    %533 = vmatprep.subr.mxu0 0.0
    %534 = vmatpush1.msra.mxu0 0.0
    %535 = vmatprep.subr.mxu0 0.0
    %536 = vmatpush1.msra.mxu0 0.0
    %537 = vmatprep.subr.mxu0 0.0
    %538 = vmatpush1.msra.mxu0 0.0
    %539 = vmatprep.subr.mxu0 0.0
    %540 = vmatpush1.msra.mxu0 0.0
    %541 = vmatprep.mubr.f32.mxu0 0.0
    %542 = vmatmul.mubr.f32.gmra.mrb[0].mxu0 %v75
    %v543 = vpop.f32.mrb[0].mxu0
    %v544 = vadd.f32 0.0, %v543
    %v545 = vpop.f32.mrb[0].mxu0
    %546 = vdwg.mxu0
    %s547 = scalar_lea.vmem %s2, 48
    %v548 = vld [vmem:[%s547] sm:$0xff]
    %v549 = vld [vmem:[%s547 + $0x8] sm:$0x3]
    %v551 = vsel %vm77, %v549, 0
    %553 = vmatprep.subr.mxu0 0.0
    %554 = vmatpush1.msra.mxu0 %v548
    %555 = vmatprep.subr.mxu0 0.0
    %556 = vmatpush1.msra.mxu0 %v551
    %557 = vmatprep.subr.mxu0 0.0
    %558 = vmatpush1.msra.mxu0 0.0
    %559 = vmatprep.subr.mxu0 0.0
    %560 = vmatpush1.msra.mxu0 0.0
    %561 = vmatprep.subr.mxu0 0.0
    %562 = vmatpush1.msra.mxu0 0.0
    %563 = vmatprep.subr.mxu0 0.0
    %564 = vmatpush1.msra.mxu0 0.0
    %565 = vmatprep.subr.mxu0 0.0
    %566 = vmatpush1.msra.mxu0 0.0
    %567 = vmatprep.subr.mxu0 0.0
    %568 = vmatpush1.msra.mxu0 0.0
    %569 = vmatprep.subr.mxu0 0.0
    %570 = vmatpush1.msra.mxu0 0.0
    %571 = vmatprep.subr.mxu0 0.0
    %572 = vmatpush1.msra.mxu0 0.0
    %573 = vmatprep.subr.mxu0 0.0
    %574 = vmatpush1.msra.mxu0 0.0
    %575 = vmatprep.subr.mxu0 0.0
    %576 = vmatpush1.msra.mxu0 0.0
    %577 = vmatprep.subr.mxu0 0.0
    %578 = vmatpush1.msra.mxu0 0.0
    %579 = vmatprep.subr.mxu0 0.0
    %580 = vmatpush1.msra.mxu0 0.0
    %581 = vmatprep.subr.mxu0 0.0
    %582 = vmatpush1.msra.mxu0 0.0
    %583 = vmatprep.subr.mxu0 0.0
    %584 = vmatpush1.msra.mxu0 0.0
    %585 = vmatprep.subr.mxu0 0.0
    %586 = vmatpush1.msra.mxu0 0.0
    %587 = vmatprep.subr.mxu0 0.0
    %588 = vmatpush1.msra.mxu0 0.0
    %589 = vmatprep.subr.mxu0 0.0
    %590 = vmatpush1.msra.mxu0 0.0
    %591 = vmatprep.subr.mxu0 0.0
    %592 = vmatpush1.msra.mxu0 0.0
    %593 = vmatprep.subr.mxu0 0.0
    %594 = vmatpush1.msra.mxu0 0.0
    %595 = vmatprep.subr.mxu0 0.0
    %596 = vmatpush1.msra.mxu0 0.0
    %597 = vmatprep.subr.mxu0 0.0
    %598 = vmatpush1.msra.mxu0 0.0
    %599 = vmatprep.subr.mxu0 0.0
    %600 = vmatpush1.msra.mxu0 0.0
    %601 = vmatprep.subr.mxu0 0.0
    %602 = vmatpush1.msra.mxu0 0.0
    %603 = vmatprep.subr.mxu0 0.0
    %604 = vmatpush1.msra.mxu0 0.0
    %605 = vmatprep.subr.mxu0 0.0
    %606 = vmatpush1.msra.mxu0 0.0
    %607 = vmatprep.subr.mxu0 0.0
    %608 = vmatpush1.msra.mxu0 0.0
    %609 = vmatprep.subr.mxu0 0.0
    %610 = vmatpush1.msra.mxu0 0.0
    %611 = vmatprep.subr.mxu0 0.0
    %612 = vmatpush1.msra.mxu0 0.0
    %613 = vmatprep.subr.mxu0 0.0
    %614 = vmatpush1.msra.mxu0 0.0
    %615 = vmatprep.subr.mxu0 0.0
    %616 = vmatpush1.msra.mxu0 0.0
    %617 = vmatprep.mubr.f32.mxu0 0.0
    %618 = vmatmul.mubr.f32.gmra.mrb[0].mxu0 %v75
    %v619 = vpop.f32.mrb[0].mxu0
    %v620 = vadd.f32 0.0, %v619
    %v621 = vpop.f32.mrb[0].mxu0
    %622 = vdwg.mxu0
    %s623 = scalar_lea.vmem %s2, 80
    %v624 = vld [vmem:[%s623] sm:$0xff]
    %v625 = vld [vmem:[%s623 + $0x8] sm:$0x3]
    %v627 = vsel %vm77, %v625, 0
    %629 = vmatprep.subr.mxu0 0.0
    %630 = vmatpush1.msra.mxu0 %v624
    %631 = vmatprep.subr.mxu0 0.0
    %632 = vmatpush1.msra.mxu0 %v627
    %633 = vmatprep.subr.mxu0 0.0
    %634 = vmatpush1.msra.mxu0 0.0
    %635 = vmatprep.subr.mxu0 0.0
    %636 = vmatpush1.msra.mxu0 0.0
    %637 = vmatprep.subr.mxu0 0.0
    %638 = vmatpush1.msra.mxu0 0.0
    %639 = vmatprep.subr.mxu0 0.0
    %640 = vmatpush1.msra.mxu0 0.0
    %641 = vmatprep.subr.mxu0 0.0
    %642 = vmatpush1.msra.mxu0 0.0
    %643 = vmatprep.subr.mxu0 0.0
    %644 = vmatpush1.msra.mxu0 0.0
    %645 = vmatprep.subr.mxu0 0.0
    %646 = vmatpush1.msra.mxu0 0.0
    %647 = vmatprep.subr.mxu0 0.0
    %648 = vmatpush1.msra.mxu0 0.0
    %649 = vmatprep.subr.mxu0 0.0
    %650 = vmatpush1.msra.mxu0 0.0
    %651 = vmatprep.subr.mxu0 0.0
    %652 = vmatpush1.msra.mxu0 0.0
    %653 = vmatprep.subr.mxu0 0.0
    %654 = vmatpush1.msra.mxu0 0.0
    %655 = vmatprep.subr.mxu0 0.0
    %656 = vmatpush1.msra.mxu0 0.0
    %657 = vmatprep.subr.mxu0 0.0
    %658 = vmatpush1.msra.mxu0 0.0
    %659 = vmatprep.subr.mxu0 0.0
    %660 = vmatpush1.msra.mxu0 0.0
    %661 = vmatprep.subr.mxu0 0.0
    %662 = vmatpush1.msra.mxu0 0.0
    %663 = vmatprep.subr.mxu0 0.0
    %664 = vmatpush1.msra.mxu0 0.0
    %665 = vmatprep.subr.mxu0 0.0
    %666 = vmatpush1.msra.mxu0 0.0
    %667 = vmatprep.subr.mxu0 0.0
    %668 = vmatpush1.msra.mxu0 0.0
    %669 = vmatprep.subr.mxu0 0.0
    %670 = vmatpush1.msra.mxu0 0.0
    %671 = vmatprep.subr.mxu0 0.0
    %672 = vmatpush1.msra.mxu0 0.0
    %673 = vmatprep.subr.mxu0 0.0
    %674 = vmatpush1.msra.mxu0 0.0
    %675 = vmatprep.subr.mxu0 0.0
    %676 = vmatpush1.msra.mxu0 0.0
    %677 = vmatprep.subr.mxu0 0.0
    %678 = vmatpush1.msra.mxu0 0.0
    %679 = vmatprep.subr.mxu0 0.0
    %680 = vmatpush1.msra.mxu0 0.0
    %681 = vmatprep.subr.mxu0 0.0
    %682 = vmatpush1.msra.mxu0 0.0
    %683 = vmatprep.subr.mxu0 0.0
    %684 = vmatpush1.msra.mxu0 0.0
    %685 = vmatprep.subr.mxu0 0.0
    %686 = vmatpush1.msra.mxu0 0.0
    %687 = vmatprep.subr.mxu0 0.0
    %688 = vmatpush1.msra.mxu0 0.0
    %689 = vmatprep.subr.mxu0 0.0
    %690 = vmatpush1.msra.mxu0 0.0
    %691 = vmatprep.subr.mxu0 0.0
    %692 = vmatpush1.msra.mxu0 0.0
    %693 = vmatprep.mubr.f32.mxu0 0.0
    %694 = vmatmul.mubr.f32.gmra.mrb[0].mxu0 %v75
    %v695 = vpop.f32.mrb[0].mxu0
    %v696 = vadd.f32 0.0, %v695
    %v697 = vpop.f32.mrb[0].mxu0
    %698 = vdwg.mxu0
    %v700 = vsel %vm303, %v544, 0
    %v703 = vsel %vm303, %v620, 0
    %705 = vmatprep.subr.mxu0 0.0
    %706 = vmatpush1.xpose.msra.mxu0 %v703
    %707 = vmatprep.subr.mxu0 0.0
    %708 = vmatpush1.xpose.msra.mxu0 0.0
    %709 = vmatprep.subr.mxu0 0.0
    %710 = vmatpush1.xpose.msra.mxu0 0.0
    %711 = vmatprep.subr.mxu0 0.0
    %712 = vmatpush1.xpose.msra.mxu0 0.0
    %713 = vmatprep.subr.mxu0 0.0
    %714 = vmatpush1.xpose.msra.mxu0 0.0
    %715 = vmatprep.subr.mxu0 0.0
    %716 = vmatpush1.xpose.msra.mxu0 0.0
    %717 = vmatprep.subr.mxu0 0.0
    %718 = vmatpush1.xpose.msra.mxu0 0.0
    %719 = vmatprep.subr.mxu0 0.0
    %720 = vmatpush1.xpose.msra.mxu0 0.0
    %721 = vmatprep.subr.mxu0 0.0
    %722 = vmatpush1.xpose.msra.mxu0 0.0
    %723 = vmatprep.subr.mxu0 0.0
    %724 = vmatpush1.xpose.msra.mxu0 0.0
    %725 = vmatprep.subr.mxu0 0.0
    %726 = vmatpush1.xpose.msra.mxu0 0.0
    %727 = vmatprep.subr.mxu0 0.0
    %728 = vmatpush1.xpose.msra.mxu0 0.0
    %729 = vmatprep.subr.mxu0 0.0
    %730 = vmatpush1.xpose.msra.mxu0 0.0
    %731 = vmatprep.subr.mxu0 0.0
    %732 = vmatpush1.xpose.msra.mxu0 0.0
    %733 = vmatprep.subr.mxu0 0.0
    %734 = vmatpush1.xpose.msra.mxu0 0.0
    %735 = vmatprep.subr.mxu0 0.0
    %736 = vmatpush1.xpose.msra.mxu0 0.0
    %737 = vmatprep.subr.mxu0 0.0
    %738 = vmatpush1.xpose.msra.mxu0 0.0
    %739 = vmatprep.subr.mxu0 0.0
    %740 = vmatpush1.xpose.msra.mxu0 0.0
    %741 = vmatprep.subr.mxu0 0.0
    %742 = vmatpush1.xpose.msra.mxu0 0.0
    %743 = vmatprep.subr.mxu0 0.0
    %744 = vmatpush1.xpose.msra.mxu0 0.0
    %745 = vmatprep.subr.mxu0 0.0
    %746 = vmatpush1.xpose.msra.mxu0 0.0
    %747 = vmatprep.subr.mxu0 0.0
    %748 = vmatpush1.xpose.msra.mxu0 0.0
    %749 = vmatprep.subr.mxu0 0.0
    %750 = vmatpush1.xpose.msra.mxu0 0.0
    %751 = vmatprep.subr.mxu0 0.0
    %752 = vmatpush1.xpose.msra.mxu0 0.0
    %753 = vmatprep.subr.mxu0 0.0
    %754 = vmatpush1.xpose.msra.mxu0 0.0
    %755 = vmatprep.subr.mxu0 0.0
    %756 = vmatpush1.xpose.msra.mxu0 0.0
    %757 = vmatprep.subr.mxu0 0.0
    %758 = vmatpush1.xpose.msra.mxu0 0.0
    %759 = vmatprep.subr.mxu0 0.0
    %760 = vmatpush1.xpose.msra.mxu0 0.0
    %761 = vmatprep.subr.mxu0 0.0
    %762 = vmatpush1.xpose.msra.mxu0 0.0
    %763 = vmatprep.subr.mxu0 0.0
    %764 = vmatpush1.xpose.msra.mxu0 0.0
    %765 = vmatprep.subr.mxu0 0.0
    %766 = vmatpush1.xpose.msra.mxu0 0.0
    %767 = vmatprep.subr.mxu0 0.0
    %768 = vmatpush1.xpose.msra.mxu0 0.0
    %769 = vmatprep.mubr.f32.mxu0 0.0
    %770 = vmatmul.mubr.f32.gmra.mrb[0].mxu0 %v700
    %v771 = vpop.f32.mrb[0].mxu0
    %v772 = vadd.f32 %v43, %v771
    %v773 = vpop.f32.mrb[0].mxu0
    %774 = vdwg.mxu0
    %v775 = vsel %vm380, %v772, -inf
    %776 = vmax.xlane.f32.xlu0 %v775
    %v777 = vpop.xlane.xlu0 %776
    %v778 = vsub.f32 %v772, %v777
    %v779 = vmul.f32 %v778, 1.442695
    %v780 = vpow.pop %v779
    %v781 = vsel %vm380, %v780, 0.0
    %782 = vadd.xlane.f32.xlu0 %v781
    %v783 = vpop.xlane.xlu0 %782
    %v784 = vrcp.pop %v783
    %v785 = vmul.f32 %v780, %v784
    %v787 = vsel %vm392, %v785, 0
    %v790 = vsel %vm396, %v696, 0
    %792 = vmatprep.subr.mxu0 0.0
    %793 = vmatpush1.msra.mxu0 %v790
    %794 = vmatprep.subr.mxu0 0.0
    %795 = vmatpush1.msra.mxu0 0.0
    %796 = vmatprep.subr.mxu0 0.0
    %797 = vmatpush1.msra.mxu0 0.0
    %798 = vmatprep.subr.mxu0 0.0
    %799 = vmatpush1.msra.mxu0 0.0
    %800 = vmatprep.subr.mxu0 0.0
    %801 = vmatpush1.msra.mxu0 0.0
    %802 = vmatprep.subr.mxu0 0.0
    %803 = vmatpush1.msra.mxu0 0.0
    %804 = vmatprep.subr.mxu0 0.0
    %805 = vmatpush1.msra.mxu0 0.0
    %806 = vmatprep.subr.mxu0 0.0
    %807 = vmatpush1.msra.mxu0 0.0
    %808 = vmatprep.subr.mxu0 0.0
    %809 = vmatpush1.msra.mxu0 0.0
    %810 = vmatprep.subr.mxu0 0.0
    %811 = vmatpush1.msra.mxu0 0.0
    %812 = vmatprep.subr.mxu0 0.0
    %813 = vmatpush1.msra.mxu0 0.0
    %814 = vmatprep.subr.mxu0 0.0
    %815 = vmatpush1.msra.mxu0 0.0
    %816 = vmatprep.subr.mxu0 0.0
    %817 = vmatpush1.msra.mxu0 0.0
    %818 = vmatprep.subr.mxu0 0.0
    %819 = vmatpush1.msra.mxu0 0.0
    %820 = vmatprep.subr.mxu0 0.0
    %821 = vmatpush1.msra.mxu0 0.0
    %822 = vmatprep.subr.mxu0 0.0
    %823 = vmatpush1.msra.mxu0 0.0
    %824 = vmatprep.subr.mxu0 0.0
    %825 = vmatpush1.msra.mxu0 0.0
    %826 = vmatprep.subr.mxu0 0.0
    %827 = vmatpush1.msra.mxu0 0.0
    %828 = vmatprep.subr.mxu0 0.0
    %829 = vmatpush1.msra.mxu0 0.0
    %830 = vmatprep.subr.mxu0 0.0
    %831 = vmatpush1.msra.mxu0 0.0
    %832 = vmatprep.subr.mxu0 0.0
    %833 = vmatpush1.msra.mxu0 0.0
    %834 = vmatprep.subr.mxu0 0.0
    %835 = vmatpush1.msra.mxu0 0.0
    %836 = vmatprep.subr.mxu0 0.0
    %837 = vmatpush1.msra.mxu0 0.0
    %838 = vmatprep.subr.mxu0 0.0
    %839 = vmatpush1.msra.mxu0 0.0
    %840 = vmatprep.subr.mxu0 0.0
    %841 = vmatpush1.msra.mxu0 0.0
    %842 = vmatprep.subr.mxu0 0.0
    %843 = vmatpush1.msra.mxu0 0.0
    %844 = vmatprep.subr.mxu0 0.0
    %845 = vmatpush1.msra.mxu0 0.0
    %846 = vmatprep.subr.mxu0 0.0
    %847 = vmatpush1.msra.mxu0 0.0
    %848 = vmatprep.subr.mxu0 0.0
    %849 = vmatpush1.msra.mxu0 0.0
    %850 = vmatprep.subr.mxu0 0.0
    %851 = vmatpush1.msra.mxu0 0.0
    %852 = vmatprep.subr.mxu0 0.0
    %853 = vmatpush1.msra.mxu0 0.0
    %854 = vmatprep.subr.mxu0 0.0
    %855 = vmatpush1.msra.mxu0 0.0
    %856 = vmatprep.mubr.f32.mxu0 0.0
    %857 = vmatmul.mubr.f32.gmra.mrb[0].mxu0 %v787
    %v858 = vpop.f32.mrb[0].mxu0
    %v859 = vadd.f32 0.0, %v858
    %v860 = vpop.f32.mrb[0].mxu0
    %861 = vdwg.mxu0
    %s862 = scalar_lea.vmem %s3, 8
    %v863 = vld [vmem:[%s862] sm:$0x1f]
    %v865 = vsel %vm303, %v859, 0
    %vm867 = vcmask 1044480
    %v869 = vsel %vm867, %v863, 0
    %871 = vmatprep.subr.mxu0 0.0
    %872 = vmatpush1.msra.mxu0 %v869
    %873 = vmatprep.subr.mxu0 0.0
    %874 = vmatpush1.msra.mxu0 0.0
    %875 = vmatprep.subr.mxu0 0.0
    %876 = vmatpush1.msra.mxu0 0.0
    %877 = vmatprep.subr.mxu0 0.0
    %878 = vmatpush1.msra.mxu0 0.0
    %879 = vmatprep.subr.mxu0 0.0
    %880 = vmatpush1.msra.mxu0 0.0
    %881 = vmatprep.subr.mxu0 0.0
    %882 = vmatpush1.msra.mxu0 0.0
    %883 = vmatprep.subr.mxu0 0.0
    %884 = vmatpush1.msra.mxu0 0.0
    %885 = vmatprep.subr.mxu0 0.0
    %886 = vmatpush1.msra.mxu0 0.0
    %887 = vmatprep.subr.mxu0 0.0
    %888 = vmatpush1.msra.mxu0 0.0
    %889 = vmatprep.subr.mxu0 0.0
    %890 = vmatpush1.msra.mxu0 0.0
    %891 = vmatprep.subr.mxu0 0.0
    %892 = vmatpush1.msra.mxu0 0.0
    %893 = vmatprep.subr.mxu0 0.0
    %894 = vmatpush1.msra.mxu0 0.0
    %895 = vmatprep.subr.mxu0 0.0
    %896 = vmatpush1.msra.mxu0 0.0
    %897 = vmatprep.subr.mxu0 0.0
    %898 = vmatpush1.msra.mxu0 0.0
    %899 = vmatprep.subr.mxu0 0.0
    %900 = vmatpush1.msra.mxu0 0.0
    %901 = vmatprep.subr.mxu0 0.0
    %902 = vmatpush1.msra.mxu0 0.0
    %903 = vmatprep.subr.mxu0 0.0
    %904 = vmatpush1.msra.mxu0 0.0
    %905 = vmatprep.subr.mxu0 0.0
    %906 = vmatpush1.msra.mxu0 0.0
    %907 = vmatprep.subr.mxu0 0.0
    %908 = vmatpush1.msra.mxu0 0.0
    %909 = vmatprep.subr.mxu0 0.0
    %910 = vmatpush1.msra.mxu0 0.0
    %911 = vmatprep.subr.mxu0 0.0
    %912 = vmatpush1.msra.mxu0 0.0
    %913 = vmatprep.subr.mxu0 0.0
    %914 = vmatpush1.msra.mxu0 0.0
    %915 = vmatprep.subr.mxu0 0.0
    %916 = vmatpush1.msra.mxu0 0.0
    %917 = vmatprep.subr.mxu0 0.0
    %918 = vmatpush1.msra.mxu0 0.0
    %919 = vmatprep.subr.mxu0 0.0
    %920 = vmatpush1.msra.mxu0 0.0
    %921 = vmatprep.subr.mxu0 0.0
    %922 = vmatpush1.msra.mxu0 0.0
    %923 = vmatprep.subr.mxu0 0.0
    %924 = vmatpush1.msra.mxu0 0.0
    %925 = vmatprep.subr.mxu0 0.0
    %926 = vmatpush1.msra.mxu0 0.0
    %927 = vmatprep.subr.mxu0 0.0
    %928 = vmatpush1.msra.mxu0 0.0
    %929 = vmatprep.subr.mxu0 0.0
    %930 = vmatpush1.msra.mxu0 0.0
    %931 = vmatprep.subr.mxu0 0.0
    %932 = vmatpush1.msra.mxu0 0.0
    %933 = vmatprep.subr.mxu0 0.0
    %934 = vmatpush1.msra.mxu0 0.0
    %935 = vmatprep.mubr.f32.mxu0 0.0
    %936 = vmatmul.mubr.f32.gmra.mrb[0].mxu0 %v865
    %v937 = vpop.f32.mrb[0].mxu0
    %v938 = vadd.f32 0.0, %v937
    %v939 = vpop.f32.mrb[0].mxu0
    %940 = vdwg.mxu0
    %v942 = vsel %vm303, %v467, 0
    %v945 = vsel %vm867, %v470, 0
    %947 = vmatprep.subr.mxu0 0.0
    %948 = vmatpush1.msra.mxu0 %v945
    %949 = vmatprep.subr.mxu0 0.0
    %950 = vmatpush1.msra.mxu0 0.0
    %951 = vmatprep.subr.mxu0 0.0
    %952 = vmatpush1.msra.mxu0 0.0
    %953 = vmatprep.subr.mxu0 0.0
    %954 = vmatpush1.msra.mxu0 0.0
    %955 = vmatprep.subr.mxu0 0.0
    %956 = vmatpush1.msra.mxu0 0.0
    %957 = vmatprep.subr.mxu0 0.0
    %958 = vmatpush1.msra.mxu0 0.0
    %959 = vmatprep.subr.mxu0 0.0
    %960 = vmatpush1.msra.mxu0 0.0
    %961 = vmatprep.subr.mxu0 0.0
    %962 = vmatpush1.msra.mxu0 0.0
    %963 = vmatprep.subr.mxu0 0.0
    %964 = vmatpush1.msra.mxu0 0.0
    %965 = vmatprep.subr.mxu0 0.0
    %966 = vmatpush1.msra.mxu0 0.0
    %967 = vmatprep.subr.mxu0 0.0
    %968 = vmatpush1.msra.mxu0 0.0
    %969 = vmatprep.subr.mxu0 0.0
    %970 = vmatpush1.msra.mxu0 0.0
    %971 = vmatprep.subr.mxu0 0.0
    %972 = vmatpush1.msra.mxu0 0.0
    %973 = vmatprep.subr.mxu0 0.0
    %974 = vmatpush1.msra.mxu0 0.0
    %975 = vmatprep.subr.mxu0 0.0
    %976 = vmatpush1.msra.mxu0 0.0
    %977 = vmatprep.subr.mxu0 0.0
    %978 = vmatpush1.msra.mxu0 0.0
    %979 = vmatprep.subr.mxu0 0.0
    %980 = vmatpush1.msra.mxu0 0.0
    %981 = vmatprep.subr.mxu0 0.0
    %982 = vmatpush1.msra.mxu0 0.0
    %983 = vmatprep.subr.mxu0 0.0
    %984 = vmatpush1.msra.mxu0 0.0
    %985 = vmatprep.subr.mxu0 0.0
    %986 = vmatpush1.msra.mxu0 0.0
    %987 = vmatprep.subr.mxu0 0.0
    %988 = vmatpush1.msra.mxu0 0.0
    %989 = vmatprep.subr.mxu0 0.0
    %990 = vmatpush1.msra.mxu0 0.0
    %991 = vmatprep.subr.mxu0 0.0
    %992 = vmatpush1.msra.mxu0 0.0
    %993 = vmatprep.subr.mxu0 0.0
    %994 = vmatpush1.msra.mxu0 0.0
    %995 = vmatprep.subr.mxu0 0.0
    %996 = vmatpush1.msra.mxu0 0.0
    %997 = vmatprep.subr.mxu0 0.0
    %998 = vmatpush1.msra.mxu0 0.0
    %999 = vmatprep.subr.mxu0 0.0
    %1000 = vmatpush1.msra.mxu0 0.0
    %1001 = vmatprep.subr.mxu0 0.0
    %1002 = vmatpush1.msra.mxu0 0.0
    %1003 = vmatprep.subr.mxu0 0.0
    %1004 = vmatpush1.msra.mxu0 0.0
    %1005 = vmatprep.subr.mxu0 0.0
    %1006 = vmatpush1.msra.mxu0 0.0
    %1007 = vmatprep.subr.mxu0 0.0
    %1008 = vmatpush1.msra.mxu0 0.0
    %1009 = vmatprep.subr.mxu0 0.0
    %1010 = vmatpush1.msra.mxu0 0.0
    %1011 = vmatprep.mubr.f32.mxu0 0.0
    %1012 = vmatmul.mubr.f32.gmra.mrb[0].mxu0 %v942
    %v1013 = vpop.f32.mrb[0].mxu0
    %v1014 = vadd.f32 %v938, %v1013
    %v1015 = vpop.f32.mrb[0].mxu0
    %1016 = vdwg.mxu0
    %v1017 = vadd.f32 %v42, %v1014
    %v1018 = vld [vmem:[%s4 + $0x1] sm:$0x1]
    %v1019 = vld [vmem:[%s5 + $0x1] sm:$0x1]
    %v1020 = vsel %vm46, %v1017, 0.0
    %1021 = vadd.xlane.f32.xlu0 %v1020
    %v1022 = vpop.xlane.xlu0 %1021
    %v1023 = vmul.f32 %v1022, %v50
    %v1024 = vsub.f32 %v1017, %v1023
    %v1025 = vmul.f32 %v1024, %v1024
    %v1026 = vsel %vm46, %v1025, 0.0
    %1027 = vadd.xlane.f32.xlu0 %v1026
    %v1028 = vpop.xlane.xlu0 %1027
    %v1029 = vmul.f32 %v1028, %v50
    %v1030 = vadd.f32 %v1029, 1e-06
    %v1031 = vrsqrt.pop %v1030
    %v1032 = vmul.f32 %v1024, %v1031
    %v1033 = vlaneseq
    %v1034 = vshrl.u32 %v1033, 7
    %v1035 = vsub.s32 0, %v1034
    %v1036 = vrot.slane %v1018, %v1035
    %v1037 = vmul.f32 %v1032, %v1036
    %v1038 = vlaneseq
    %v1039 = vshrl.u32 %v1038, 7
    %v1040 = vsub.s32 0, %v1039
    %v1041 = vrot.slane %v1019, %v1040
    %v1042 = vadd.f32 %v1037, %v1041
    %v1043 = vld [vmem:[%s6] sm:$0xff]
    %v1044 = vld [vmem:[%s6 + $0x8] sm:$0x3]
    %v1045 = vld [vmem:[%s7] sm:$0x1]
    %v1046 = vlaneseq
    %v1047 = vshrl.u32 %v1046, 7
    %v1048 = vsub.s32 0, %v1047
    %v1049 = vrot.slane %v1045, %v1048
    %v1051 = vsel %vm73, %v1042, 0
    %v1054 = vsel %vm77, %v1044, 0
    %1056 = vmatprep.subr.mxu0 0.0
    %1057 = vmatpush1.msra.mxu0 %v1043
    %1058 = vmatprep.subr.mxu0 0.0
    %1059 = vmatpush1.msra.mxu0 %v1054
    %1060 = vmatprep.subr.mxu0 0.0
    %1061 = vmatpush1.msra.mxu0 0.0
    %1062 = vmatprep.subr.mxu0 0.0
    %1063 = vmatpush1.msra.mxu0 0.0
    %1064 = vmatprep.subr.mxu0 0.0
    %1065 = vmatpush1.msra.mxu0 0.0
    %1066 = vmatprep.subr.mxu0 0.0
    %1067 = vmatpush1.msra.mxu0 0.0
    %1068 = vmatprep.subr.mxu0 0.0
    %1069 = vmatpush1.msra.mxu0 0.0
    %1070 = vmatprep.subr.mxu0 0.0
    %1071 = vmatpush1.msra.mxu0 0.0
    %1072 = vmatprep.subr.mxu0 0.0
    %1073 = vmatpush1.msra.mxu0 0.0
    %1074 = vmatprep.subr.mxu0 0.0
    %1075 = vmatpush1.msra.mxu0 0.0
    %1076 = vmatprep.subr.mxu0 0.0
    %1077 = vmatpush1.msra.mxu0 0.0
    %1078 = vmatprep.subr.mxu0 0.0
    %1079 = vmatpush1.msra.mxu0 0.0
    %1080 = vmatprep.subr.mxu0 0.0
    %1081 = vmatpush1.msra.mxu0 0.0
    %1082 = vmatprep.subr.mxu0 0.0
    %1083 = vmatpush1.msra.mxu0 0.0
    %1084 = vmatprep.subr.mxu0 0.0
    %1085 = vmatpush1.msra.mxu0 0.0
    %1086 = vmatprep.subr.mxu0 0.0
    %1087 = vmatpush1.msra.mxu0 0.0
    %1088 = vmatprep.subr.mxu0 0.0
    %1089 = vmatpush1.msra.mxu0 0.0
    %1090 = vmatprep.subr.mxu0 0.0
    %1091 = vmatpush1.msra.mxu0 0.0
    %1092 = vmatprep.subr.mxu0 0.0
    %1093 = vmatpush1.msra.mxu0 0.0
    %1094 = vmatprep.subr.mxu0 0.0
    %1095 = vmatpush1.msra.mxu0 0.0
    %1096 = vmatprep.subr.mxu0 0.0
    %1097 = vmatpush1.msra.mxu0 0.0
    %1098 = vmatprep.subr.mxu0 0.0
    %1099 = vmatpush1.msra.mxu0 0.0
    %1100 = vmatprep.subr.mxu0 0.0
    %1101 = vmatpush1.msra.mxu0 0.0
    %1102 = vmatprep.subr.mxu0 0.0
    %1103 = vmatpush1.msra.mxu0 0.0
    %1104 = vmatprep.subr.mxu0 0.0
    %1105 = vmatpush1.msra.mxu0 0.0
    %1106 = vmatprep.subr.mxu0 0.0
    %1107 = vmatpush1.msra.mxu0 0.0
    %1108 = vmatprep.subr.mxu0 0.0
    %1109 = vmatpush1.msra.mxu0 0.0
    %1110 = vmatprep.subr.mxu0 0.0
    %1111 = vmatpush1.msra.mxu0 0.0
    %1112 = vmatprep.subr.mxu0 0.0
    %1113 = vmatpush1.msra.mxu0 0.0
    %1114 = vmatprep.subr.mxu0 0.0
    %1115 = vmatpush1.msra.mxu0 0.0
    %1116 = vmatprep.subr.mxu0 0.0
    %1117 = vmatpush1.msra.mxu0 0.0
    %1118 = vmatprep.subr.mxu0 0.0
    %1119 = vmatpush1.msra.mxu0 0.0
    %1120 = vmatprep.mubr.f32.mxu0 0.0
    %1121 = vmatmul.mubr.f32.gmra.mrb[0].mxu0 %v1051
    %v1122 = vpop.f32.mrb[0].mxu0
    %v1123 = vadd.f32 %v1049, %v1122
    %v1124 = vpop.f32.mrb[0].mxu0
    %1125 = vdwg.mxu0
    %v1126 = vmax.f32 %v1123, 0.0
    %v1127 = vld [vmem:[%s8] sm:$0xff]
    %v1128 = vld [vmem:[%s8 + $0x8] sm:$0xff]
    %v1129 = vld [vmem:[%s8 + $0x10] sm:$0xff]
    %v1130 = vld [vmem:[%s9] sm:$0x1]
    %v1131 = vlaneseq
    %v1132 = vshrl.u32 %v1131, 7
    %v1133 = vsub.s32 0, %v1132
    %v1134 = vrot.slane %v1130, %v1133
    %vm1135 = vcmask 195584
    %v1137 = vsel %vm1135, %v1126, 0
    %1139 = vmatprep.subr.mxu0 0.0
    %1140 = vmatpush1.msra.mxu0 %v1127
    %1141 = vmatprep.subr.mxu0 0.0
    %1142 = vmatpush1.msra.mxu0 %v1128
    %1143 = vmatprep.subr.mxu0 0.0
    %1144 = vmatpush1.msra.mxu0 %v1129
    %1145 = vmatprep.subr.mxu0 0.0
    %1146 = vmatpush1.msra.mxu0 0.0
    %1147 = vmatprep.subr.mxu0 0.0
    %1148 = vmatpush1.msra.mxu0 0.0
    %1149 = vmatprep.subr.mxu0 0.0
    %1150 = vmatpush1.msra.mxu0 0.0
    %1151 = vmatprep.subr.mxu0 0.0
    %1152 = vmatpush1.msra.mxu0 0.0
    %1153 = vmatprep.subr.mxu0 0.0
    %1154 = vmatpush1.msra.mxu0 0.0
    %1155 = vmatprep.subr.mxu0 0.0
    %1156 = vmatpush1.msra.mxu0 0.0
    %1157 = vmatprep.subr.mxu0 0.0
    %1158 = vmatpush1.msra.mxu0 0.0
    %1159 = vmatprep.subr.mxu0 0.0
    %1160 = vmatpush1.msra.mxu0 0.0
    %1161 = vmatprep.subr.mxu0 0.0
    %1162 = vmatpush1.msra.mxu0 0.0
    %1163 = vmatprep.subr.mxu0 0.0
    %1164 = vmatpush1.msra.mxu0 0.0
    %1165 = vmatprep.subr.mxu0 0.0
    %1166 = vmatpush1.msra.mxu0 0.0
    %1167 = vmatprep.subr.mxu0 0.0
    %1168 = vmatpush1.msra.mxu0 0.0
    %1169 = vmatprep.subr.mxu0 0.0
    %1170 = vmatpush1.msra.mxu0 0.0
    %1171 = vmatprep.subr.mxu0 0.0
    %1172 = vmatpush1.msra.mxu0 0.0
    %1173 = vmatprep.subr.mxu0 0.0
    %1174 = vmatpush1.msra.mxu0 0.0
    %1175 = vmatprep.subr.mxu0 0.0
    %1176 = vmatpush1.msra.mxu0 0.0
    %1177 = vmatprep.subr.mxu0 0.0
    %1178 = vmatpush1.msra.mxu0 0.0
    %1179 = vmatprep.subr.mxu0 0.0
    %1180 = vmatpush1.msra.mxu0 0.0
    %1181 = vmatprep.subr.mxu0 0.0
    %1182 = vmatpush1.msra.mxu0 0.0
    %1183 = vmatprep.subr.mxu0 0.0
    %1184 = vmatpush1.msra.mxu0 0.0
    %1185 = vmatprep.subr.mxu0 0.0
    %1186 = vmatpush1.msra.mxu0 0.0
    %1187 = vmatprep.subr.mxu0 0.0
    %1188 = vmatpush1.msra.mxu0 0.0
    %1189 = vmatprep.subr.mxu0 0.0
    %1190 = vmatpush1.msra.mxu0 0.0
    %1191 = vmatprep.subr.mxu0 0.0
    %1192 = vmatpush1.msra.mxu0 0.0
    %1193 = vmatprep.subr.mxu0 0.0
    %1194 = vmatpush1.msra.mxu0 0.0
    %1195 = vmatprep.subr.mxu0 0.0
    %1196 = vmatpush1.msra.mxu0 0.0
    %1197 = vmatprep.subr.mxu0 0.0
    %1198 = vmatpush1.msra.mxu0 0.0
    %1199 = vmatprep.subr.mxu0 0.0
    %1200 = vmatpush1.msra.mxu0 0.0
    %1201 = vmatprep.subr.mxu0 0.0
    %1202 = vmatpush1.msra.mxu0 0.0
    %1203 = vmatprep.mubr.f32.mxu0 0.0
    %1204 = vmatmul.mubr.f32.gmra.mrb[0].mxu0 %v1137
    %v1205 = vpop.f32.mrb[0].mxu0
    %v1206 = vadd.f32 %v1134, %v1205
    %v1207 = vpop.f32.mrb[0].mxu0
    %1208 = vdwg.mxu0
    %v1209 = vadd.f32 %v1017, %v1206
    %v1210 = vld [vmem:[%s4 + $0x2] sm:$0x1]
    %v1211 = vld [vmem:[%s5 + $0x2] sm:$0x1]
    %v1212 = vsel %vm46, %v1209, 0.0
    %1213 = vadd.xlane.f32.xlu0 %v1212
    %v1214 = vpop.xlane.xlu0 %1213
    %v1215 = vmul.f32 %v1214, %v50
    %v1216 = vsub.f32 %v1209, %v1215
    %v1217 = vmul.f32 %v1216, %v1216
    %v1218 = vsel %vm46, %v1217, 0.0
    %1219 = vadd.xlane.f32.xlu0 %v1218
    %v1220 = vpop.xlane.xlu0 %1219
    %v1221 = vmul.f32 %v1220, %v50
    %v1222 = vadd.f32 %v1221, 1e-06
    %v1223 = vrsqrt.pop %v1222
    %v1224 = vmul.f32 %v1216, %v1223
    %v1225 = vlaneseq
    %v1226 = vshrl.u32 %v1225, 7
    %v1227 = vsub.s32 0, %v1226
    %v1228 = vrot.slane %v1210, %v1227
    %v1229 = vmul.f32 %v1224, %v1228
    %v1230 = vlaneseq
    %v1231 = vshrl.u32 %v1230, 7
    %v1232 = vsub.s32 0, %v1231
    %v1233 = vrot.slane %v1211, %v1232
    %v1234 = vadd.f32 %v1229, %v1233
    %s1235 = scalar_lea.vmem %s2, 96
    %v1236 = vld [vmem:[%s1235] sm:$0xff]
    %v1237 = vld [vmem:[%s1235 + $0x8] sm:$0x3]
    %v1239 = vsel %vm73, %v1234, 0
    %v1242 = vsel %vm77, %v1237, 0
    %1244 = vmatprep.subr.mxu0 0.0
    %1245 = vmatpush1.msra.mxu0 %v1236
    %1246 = vmatprep.subr.mxu0 0.0
    %1247 = vmatpush1.msra.mxu0 %v1242
    %1248 = vmatprep.subr.mxu0 0.0
    %1249 = vmatpush1.msra.mxu0 0.0
    %1250 = vmatprep.subr.mxu0 0.0
    %1251 = vmatpush1.msra.mxu0 0.0
    %1252 = vmatprep.subr.mxu0 0.0
    %1253 = vmatpush1.msra.mxu0 0.0
    %1254 = vmatprep.subr.mxu0 0.0
    %1255 = vmatpush1.msra.mxu0 0.0
    %1256 = vmatprep.subr.mxu0 0.0
    %1257 = vmatpush1.msra.mxu0 0.0
    %1258 = vmatprep.subr.mxu0 0.0
    %1259 = vmatpush1.msra.mxu0 0.0
    %1260 = vmatprep.subr.mxu0 0.0
    %1261 = vmatpush1.msra.mxu0 0.0
    %1262 = vmatprep.subr.mxu0 0.0
    %1263 = vmatpush1.msra.mxu0 0.0
    %1264 = vmatprep.subr.mxu0 0.0
    %1265 = vmatpush1.msra.mxu0 0.0
    %1266 = vmatprep.subr.mxu0 0.0
    %1267 = vmatpush1.msra.mxu0 0.0
    %1268 = vmatprep.subr.mxu0 0.0
    %1269 = vmatpush1.msra.mxu0 0.0
    %1270 = vmatprep.subr.mxu0 0.0
    %1271 = vmatpush1.msra.mxu0 0.0
    %1272 = vmatprep.subr.mxu0 0.0
    %1273 = vmatpush1.msra.mxu0 0.0
    %1274 = vmatprep.subr.mxu0 0.0
    %1275 = vmatpush1.msra.mxu0 0.0
    %1276 = vmatprep.subr.mxu0 0.0
    %1277 = vmatpush1.msra.mxu0 0.0
    %1278 = vmatprep.subr.mxu0 0.0
    %1279 = vmatpush1.msra.mxu0 0.0
    %1280 = vmatprep.subr.mxu0 0.0
    %1281 = vmatpush1.msra.mxu0 0.0
    %1282 = vmatprep.subr.mxu0 0.0
    %1283 = vmatpush1.msra.mxu0 0.0
    %1284 = vmatprep.subr.mxu0 0.0
    %1285 = vmatpush1.msra.mxu0 0.0
    %1286 = vmatprep.subr.mxu0 0.0
    %1287 = vmatpush1.msra.mxu0 0.0
    %1288 = vmatprep.subr.mxu0 0.0
    %1289 = vmatpush1.msra.mxu0 0.0
    %1290 = vmatprep.subr.mxu0 0.0
    %1291 = vmatpush1.msra.mxu0 0.0
    %1292 = vmatprep.subr.mxu0 0.0
    %1293 = vmatpush1.msra.mxu0 0.0
    %1294 = vmatprep.subr.mxu0 0.0
    %1295 = vmatpush1.msra.mxu0 0.0
    %1296 = vmatprep.subr.mxu0 0.0
    %1297 = vmatpush1.msra.mxu0 0.0
    %1298 = vmatprep.subr.mxu0 0.0
    %1299 = vmatpush1.msra.mxu0 0.0
    %1300 = vmatprep.subr.mxu0 0.0
    %1301 = vmatpush1.msra.mxu0 0.0
    %1302 = vmatprep.subr.mxu0 0.0
    %1303 = vmatpush1.msra.mxu0 0.0
    %1304 = vmatprep.subr.mxu0 0.0
    %1305 = vmatpush1.msra.mxu0 0.0
    %1306 = vmatprep.subr.mxu0 0.0
    %1307 = vmatpush1.msra.mxu0 0.0
    %1308 = vmatprep.mubr.f32.mxu0 0.0
    %1309 = vmatmul.mubr.f32.gmra.mrb[0].mxu0 %v1239
    %v1310 = vpop.f32.mrb[0].mxu0
    %v1311 = vadd.f32 0.0, %v1310
    %v1312 = vpop.f32.mrb[0].mxu0
    %1313 = vdwg.mxu0
    %s1314 = scalar_lea.vmem %s2, 128
    %v1315 = vld [vmem:[%s1314] sm:$0xff]
    %v1316 = vld [vmem:[%s1314 + $0x8] sm:$0x3]
    %v1318 = vsel %vm77, %v1316, 0
    %1320 = vmatprep.subr.mxu0 0.0
    %1321 = vmatpush1.msra.mxu0 %v1315
    %1322 = vmatprep.subr.mxu0 0.0
    %1323 = vmatpush1.msra.mxu0 %v1318
    %1324 = vmatprep.subr.mxu0 0.0
    %1325 = vmatpush1.msra.mxu0 0.0
    %1326 = vmatprep.subr.mxu0 0.0
    %1327 = vmatpush1.msra.mxu0 0.0
    %1328 = vmatprep.subr.mxu0 0.0
    %1329 = vmatpush1.msra.mxu0 0.0
    %1330 = vmatprep.subr.mxu0 0.0
    %1331 = vmatpush1.msra.mxu0 0.0
    %1332 = vmatprep.subr.mxu0 0.0
    %1333 = vmatpush1.msra.mxu0 0.0
    %1334 = vmatprep.subr.mxu0 0.0
    %1335 = vmatpush1.msra.mxu0 0.0
    %1336 = vmatprep.subr.mxu0 0.0
    %1337 = vmatpush1.msra.mxu0 0.0
    %1338 = vmatprep.subr.mxu0 0.0
    %1339 = vmatpush1.msra.mxu0 0.0
    %1340 = vmatprep.subr.mxu0 0.0
    %1341 = vmatpush1.msra.mxu0 0.0
    %1342 = vmatprep.subr.mxu0 0.0
    %1343 = vmatpush1.msra.mxu0 0.0
    %1344 = vmatprep.subr.mxu0 0.0
    %1345 = vmatpush1.msra.mxu0 0.0
    %1346 = vmatprep.subr.mxu0 0.0
    %1347 = vmatpush1.msra.mxu0 0.0
    %1348 = vmatprep.subr.mxu0 0.0
    %1349 = vmatpush1.msra.mxu0 0.0
    %1350 = vmatprep.subr.mxu0 0.0
    %1351 = vmatpush1.msra.mxu0 0.0
    %1352 = vmatprep.subr.mxu0 0.0
    %1353 = vmatpush1.msra.mxu0 0.0
    %1354 = vmatprep.subr.mxu0 0.0
    %1355 = vmatpush1.msra.mxu0 0.0
    %1356 = vmatprep.subr.mxu0 0.0
    %1357 = vmatpush1.msra.mxu0 0.0
    %1358 = vmatprep.subr.mxu0 0.0
    %1359 = vmatpush1.msra.mxu0 0.0
    %1360 = vmatprep.subr.mxu0 0.0
    %1361 = vmatpush1.msra.mxu0 0.0
    %1362 = vmatprep.subr.mxu0 0.0
    %1363 = vmatpush1.msra.mxu0 0.0
    %1364 = vmatprep.subr.mxu0 0.0
    %1365 = vmatpush1.msra.mxu0 0.0
    %1366 = vmatprep.subr.mxu0 0.0
    %1367 = vmatpush1.msra.mxu0 0.0
    %1368 = vmatprep.subr.mxu0 0.0
    %1369 = vmatpush1.msra.mxu0 0.0
    %1370 = vmatprep.subr.mxu0 0.0
    %1371 = vmatpush1.msra.mxu0 0.0
    %1372 = vmatprep.subr.mxu0 0.0
    %1373 = vmatpush1.msra.mxu0 0.0
    %1374 = vmatprep.subr.mxu0 0.0
    %1375 = vmatpush1.msra.mxu0 0.0
    %1376 = vmatprep.subr.mxu0 0.0
    %1377 = vmatpush1.msra.mxu0 0.0
    %1378 = vmatprep.subr.mxu0 0.0
    %1379 = vmatpush1.msra.mxu0 0.0
    %1380 = vmatprep.subr.mxu0 0.0
    %1381 = vmatpush1.msra.mxu0 0.0
    %1382 = vmatprep.subr.mxu0 0.0
    %1383 = vmatpush1.msra.mxu0 0.0
    %1384 = vmatprep.mubr.f32.mxu0 0.0
    %1385 = vmatmul.mubr.f32.gmra.mrb[0].mxu0 %v1239
    %v1386 = vpop.f32.mrb[0].mxu0
    %v1387 = vadd.f32 0.0, %v1386
    %v1388 = vpop.f32.mrb[0].mxu0
    %1389 = vdwg.mxu0
    %s1390 = scalar_lea.vmem %s2, 160
    %v1391 = vld [vmem:[%s1390] sm:$0xff]
    %v1392 = vld [vmem:[%s1390 + $0x8] sm:$0x3]
    %v1394 = vsel %vm77, %v1392, 0
    %1396 = vmatprep.subr.mxu0 0.0
    %1397 = vmatpush1.msra.mxu0 %v1391
    %1398 = vmatprep.subr.mxu0 0.0
    %1399 = vmatpush1.msra.mxu0 %v1394
    %1400 = vmatprep.subr.mxu0 0.0
    %1401 = vmatpush1.msra.mxu0 0.0
    %1402 = vmatprep.subr.mxu0 0.0
    %1403 = vmatpush1.msra.mxu0 0.0
    %1404 = vmatprep.subr.mxu0 0.0
    %1405 = vmatpush1.msra.mxu0 0.0
    %1406 = vmatprep.subr.mxu0 0.0
    %1407 = vmatpush1.msra.mxu0 0.0
    %1408 = vmatprep.subr.mxu0 0.0
    %1409 = vmatpush1.msra.mxu0 0.0
    %1410 = vmatprep.subr.mxu0 0.0
    %1411 = vmatpush1.msra.mxu0 0.0
    %1412 = vmatprep.subr.mxu0 0.0
    %1413 = vmatpush1.msra.mxu0 0.0
    %1414 = vmatprep.subr.mxu0 0.0
    %1415 = vmatpush1.msra.mxu0 0.0
    %1416 = vmatprep.subr.mxu0 0.0
    %1417 = vmatpush1.msra.mxu0 0.0
    %1418 = vmatprep.subr.mxu0 0.0
    %1419 = vmatpush1.msra.mxu0 0.0
    %1420 = vmatprep.subr.mxu0 0.0
    %1421 = vmatpush1.msra.mxu0 0.0
    %1422 = vmatprep.subr.mxu0 0.0
    %1423 = vmatpush1.msra.mxu0 0.0
    %1424 = vmatprep.subr.mxu0 0.0
    %1425 = vmatpush1.msra.mxu0 0.0
    %1426 = vmatprep.subr.mxu0 0.0
    %1427 = vmatpush1.msra.mxu0 0.0
    %1428 = vmatprep.subr.mxu0 0.0
    %1429 = vmatpush1.msra.mxu0 0.0
    %1430 = vmatprep.subr.mxu0 0.0
    %1431 = vmatpush1.msra.mxu0 0.0
    %1432 = vmatprep.subr.mxu0 0.0
    %1433 = vmatpush1.msra.mxu0 0.0
    %1434 = vmatprep.subr.mxu0 0.0
    %1435 = vmatpush1.msra.mxu0 0.0
    %1436 = vmatprep.subr.mxu0 0.0
    %1437 = vmatpush1.msra.mxu0 0.0
    %1438 = vmatprep.subr.mxu0 0.0
    %1439 = vmatpush1.msra.mxu0 0.0
    %1440 = vmatprep.subr.mxu0 0.0
    %1441 = vmatpush1.msra.mxu0 0.0
    %1442 = vmatprep.subr.mxu0 0.0
    %1443 = vmatpush1.msra.mxu0 0.0
    %1444 = vmatprep.subr.mxu0 0.0
    %1445 = vmatpush1.msra.mxu0 0.0
    %1446 = vmatprep.subr.mxu0 0.0
    %1447 = vmatpush1.msra.mxu0 0.0
    %1448 = vmatprep.subr.mxu0 0.0
    %1449 = vmatpush1.msra.mxu0 0.0
    %1450 = vmatprep.subr.mxu0 0.0
    %1451 = vmatpush1.msra.mxu0 0.0
    %1452 = vmatprep.subr.mxu0 0.0
    %1453 = vmatpush1.msra.mxu0 0.0
    %1454 = vmatprep.subr.mxu0 0.0
    %1455 = vmatpush1.msra.mxu0 0.0
    %1456 = vmatprep.subr.mxu0 0.0
    %1457 = vmatpush1.msra.mxu0 0.0
    %1458 = vmatprep.subr.mxu0 0.0
    %1459 = vmatpush1.msra.mxu0 0.0
    %1460 = vmatprep.mubr.f32.mxu0 0.0
    %1461 = vmatmul.mubr.f32.gmra.mrb[0].mxu0 %v1239
    %v1462 = vpop.f32.mrb[0].mxu0
    %v1463 = vadd.f32 0.0, %v1462
    %v1464 = vpop.f32.mrb[0].mxu0
    %1465 = vdwg.mxu0
    %v1467 = vsel %vm303, %v1311, 0
    %v1470 = vsel %vm303, %v1387, 0
    %1472 = vmatprep.subr.mxu0 0.0
    %1473 = vmatpush1.xpose.msra.mxu0 %v1470
    %1474 = vmatprep.subr.mxu0 0.0
    %1475 = vmatpush1.xpose.msra.mxu0 0.0
    %1476 = vmatprep.subr.mxu0 0.0
    %1477 = vmatpush1.xpose.msra.mxu0 0.0
    %1478 = vmatprep.subr.mxu0 0.0
    %1479 = vmatpush1.xpose.msra.mxu0 0.0
    %1480 = vmatprep.subr.mxu0 0.0
    %1481 = vmatpush1.xpose.msra.mxu0 0.0
    %1482 = vmatprep.subr.mxu0 0.0
    %1483 = vmatpush1.xpose.msra.mxu0 0.0
    %1484 = vmatprep.subr.mxu0 0.0
    %1485 = vmatpush1.xpose.msra.mxu0 0.0
    %1486 = vmatprep.subr.mxu0 0.0
    %1487 = vmatpush1.xpose.msra.mxu0 0.0
    %1488 = vmatprep.subr.mxu0 0.0
    %1489 = vmatpush1.xpose.msra.mxu0 0.0
    %1490 = vmatprep.subr.mxu0 0.0
    %1491 = vmatpush1.xpose.msra.mxu0 0.0
    %1492 = vmatprep.subr.mxu0 0.0
    %1493 = vmatpush1.xpose.msra.mxu0 0.0
    %1494 = vmatprep.subr.mxu0 0.0
    %1495 = vmatpush1.xpose.msra.mxu0 0.0
    %1496 = vmatprep.subr.mxu0 0.0
    %1497 = vmatpush1.xpose.msra.mxu0 0.0
    %1498 = vmatprep.subr.mxu0 0.0
    %1499 = vmatpush1.xpose.msra.mxu0 0.0
    %1500 = vmatprep.subr.mxu0 0.0
    %1501 = vmatpush1.xpose.msra.mxu0 0.0
    %1502 = vmatprep.subr.mxu0 0.0
    %1503 = vmatpush1.xpose.msra.mxu0 0.0
    %1504 = vmatprep.subr.mxu0 0.0
    %1505 = vmatpush1.xpose.msra.mxu0 0.0
    %1506 = vmatprep.subr.mxu0 0.0
    %1507 = vmatpush1.xpose.msra.mxu0 0.0
    %1508 = vmatprep.subr.mxu0 0.0
    %1509 = vmatpush1.xpose.msra.mxu0 0.0
    %1510 = vmatprep.subr.mxu0 0.0
    %1511 = vmatpush1.xpose.msra.mxu0 0.0
    %1512 = vmatprep.subr.mxu0 0.0
    %1513 = vmatpush1.xpose.msra.mxu0 0.0
    %1514 = vmatprep.subr.mxu0 0.0
    %1515 = vmatpush1.xpose.msra.mxu0 0.0
    %1516 = vmatprep.subr.mxu0 0.0
    %1517 = vmatpush1.xpose.msra.mxu0 0.0
    %1518 = vmatprep.subr.mxu0 0.0
    %1519 = vmatpush1.xpose.msra.mxu0 0.0
    %1520 = vmatprep.subr.mxu0 0.0
    %1521 = vmatpush1.xpose.msra.mxu0 0.0
    %1522 = vmatprep.subr.mxu0 0.0
    %1523 = vmatpush1.xpose.msra.mxu0 0.0
    %1524 = vmatprep.subr.mxu0 0.0
    %1525 = vmatpush1.xpose.msra.mxu0 0.0
    %1526 = vmatprep.subr.mxu0 0.0
    %1527 = vmatpush1.xpose.msra.mxu0 0.0
    %1528 = vmatprep.subr.mxu0 0.0
    %1529 = vmatpush1.xpose.msra.mxu0 0.0
    %1530 = vmatprep.subr.mxu0 0.0
    %1531 = vmatpush1.xpose.msra.mxu0 0.0
    %1532 = vmatprep.subr.mxu0 0.0
    %1533 = vmatpush1.xpose.msra.mxu0 0.0
    %1534 = vmatprep.subr.mxu0 0.0
    %1535 = vmatpush1.xpose.msra.mxu0 0.0
    %1536 = vmatprep.mubr.f32.mxu0 0.0
    %1537 = vmatmul.mubr.f32.gmra.mrb[0].mxu0 %v1467
    %v1538 = vpop.f32.mrb[0].mxu0
    %v1539 = vadd.f32 %v43, %v1538
    %v1540 = vpop.f32.mrb[0].mxu0
    %1541 = vdwg.mxu0
    %v1542 = vsel %vm380, %v1539, -inf
    %1543 = vmax.xlane.f32.xlu0 %v1542
    %v1544 = vpop.xlane.xlu0 %1543
    %v1545 = vsub.f32 %v1539, %v1544
    %v1546 = vmul.f32 %v1545, 1.442695
    %v1547 = vpow.pop %v1546
    %v1548 = vsel %vm380, %v1547, 0.0
    %1549 = vadd.xlane.f32.xlu0 %v1548
    %v1550 = vpop.xlane.xlu0 %1549
    %v1551 = vrcp.pop %v1550
    %v1552 = vmul.f32 %v1547, %v1551
    %v1554 = vsel %vm392, %v1552, 0
    %v1557 = vsel %vm396, %v1463, 0
    %1559 = vmatprep.subr.mxu0 0.0
    %1560 = vmatpush1.msra.mxu0 %v1557
    %1561 = vmatprep.subr.mxu0 0.0
    %1562 = vmatpush1.msra.mxu0 0.0
    %1563 = vmatprep.subr.mxu0 0.0
    %1564 = vmatpush1.msra.mxu0 0.0
    %1565 = vmatprep.subr.mxu0 0.0
    %1566 = vmatpush1.msra.mxu0 0.0
    %1567 = vmatprep.subr.mxu0 0.0
    %1568 = vmatpush1.msra.mxu0 0.0
    %1569 = vmatprep.subr.mxu0 0.0
    %1570 = vmatpush1.msra.mxu0 0.0
    %1571 = vmatprep.subr.mxu0 0.0
    %1572 = vmatpush1.msra.mxu0 0.0
    %1573 = vmatprep.subr.mxu0 0.0
    %1574 = vmatpush1.msra.mxu0 0.0
    %1575 = vmatprep.subr.mxu0 0.0
    %1576 = vmatpush1.msra.mxu0 0.0
    %1577 = vmatprep.subr.mxu0 0.0
    %1578 = vmatpush1.msra.mxu0 0.0
    %1579 = vmatprep.subr.mxu0 0.0
    %1580 = vmatpush1.msra.mxu0 0.0
    %1581 = vmatprep.subr.mxu0 0.0
    %1582 = vmatpush1.msra.mxu0 0.0
    %1583 = vmatprep.subr.mxu0 0.0
    %1584 = vmatpush1.msra.mxu0 0.0
    %1585 = vmatprep.subr.mxu0 0.0
    %1586 = vmatpush1.msra.mxu0 0.0
    %1587 = vmatprep.subr.mxu0 0.0
    %1588 = vmatpush1.msra.mxu0 0.0
    %1589 = vmatprep.subr.mxu0 0.0
    %1590 = vmatpush1.msra.mxu0 0.0
    %1591 = vmatprep.subr.mxu0 0.0
    %1592 = vmatpush1.msra.mxu0 0.0
    %1593 = vmatprep.subr.mxu0 0.0
    %1594 = vmatpush1.msra.mxu0 0.0
    %1595 = vmatprep.subr.mxu0 0.0
    %1596 = vmatpush1.msra.mxu0 0.0
    %1597 = vmatprep.subr.mxu0 0.0
    %1598 = vmatpush1.msra.mxu0 0.0
    %1599 = vmatprep.subr.mxu0 0.0
    %1600 = vmatpush1.msra.mxu0 0.0
    %1601 = vmatprep.subr.mxu0 0.0
    %1602 = vmatpush1.msra.mxu0 0.0
    %1603 = vmatprep.subr.mxu0 0.0
    %1604 = vmatpush1.msra.mxu0 0.0
    %1605 = vmatprep.subr.mxu0 0.0
    %1606 = vmatpush1.msra.mxu0 0.0
    %1607 = vmatprep.subr.mxu0 0.0
    %1608 = vmatpush1.msra.mxu0 0.0
    %1609 = vmatprep.subr.mxu0 0.0
    %1610 = vmatpush1.msra.mxu0 0.0
    %1611 = vmatprep.subr.mxu0 0.0
    %1612 = vmatpush1.msra.mxu0 0.0
    %1613 = vmatprep.subr.mxu0 0.0
    %1614 = vmatpush1.msra.mxu0 0.0
    %1615 = vmatprep.subr.mxu0 0.0
    %1616 = vmatpush1.msra.mxu0 0.0
    %1617 = vmatprep.subr.mxu0 0.0
    %1618 = vmatpush1.msra.mxu0 0.0
    %1619 = vmatprep.subr.mxu0 0.0
    %1620 = vmatpush1.msra.mxu0 0.0
    %1621 = vmatprep.subr.mxu0 0.0
    %1622 = vmatpush1.msra.mxu0 0.0
    %1623 = vmatprep.mubr.f32.mxu0 0.0
    %1624 = vmatmul.mubr.f32.gmra.mrb[0].mxu0 %v1554
    %v1625 = vpop.f32.mrb[0].mxu0
    %v1626 = vadd.f32 0.0, %v1625
    %v1627 = vpop.f32.mrb[0].mxu0
    %1628 = vdwg.mxu0
    %s1629 = scalar_lea.vmem %s3, 16
    %v1630 = vld [vmem:[%s1629] sm:$0x1f]
    %s1631 = scalar_lea.vmem %s2, 112
    %v1632 = vld [vmem:[%s1631] sm:$0xff]
    %v1633 = vld [vmem:[%s1631 + $0x8] sm:$0x3]
    %v1635 = vsel %vm77, %v1633, 0
    %1637 = vmatprep.subr.mxu0 0.0
    %1638 = vmatpush1.msra.mxu0 %v1632
    %1639 = vmatprep.subr.mxu0 0.0
    %1640 = vmatpush1.msra.mxu0 %v1635
    %1641 = vmatprep.subr.mxu0 0.0
    %1642 = vmatpush1.msra.mxu0 0.0
    %1643 = vmatprep.subr.mxu0 0.0
    %1644 = vmatpush1.msra.mxu0 0.0
    %1645 = vmatprep.subr.mxu0 0.0
    %1646 = vmatpush1.msra.mxu0 0.0
    %1647 = vmatprep.subr.mxu0 0.0
    %1648 = vmatpush1.msra.mxu0 0.0
    %1649 = vmatprep.subr.mxu0 0.0
    %1650 = vmatpush1.msra.mxu0 0.0
    %1651 = vmatprep.subr.mxu0 0.0
    %1652 = vmatpush1.msra.mxu0 0.0
    %1653 = vmatprep.subr.mxu0 0.0
    %1654 = vmatpush1.msra.mxu0 0.0
    %1655 = vmatprep.subr.mxu0 0.0
    %1656 = vmatpush1.msra.mxu0 0.0
    %1657 = vmatprep.subr.mxu0 0.0
    %1658 = vmatpush1.msra.mxu0 0.0
    %1659 = vmatprep.subr.mxu0 0.0
    %1660 = vmatpush1.msra.mxu0 0.0
    %1661 = vmatprep.subr.mxu0 0.0
    %1662 = vmatpush1.msra.mxu0 0.0
    %1663 = vmatprep.subr.mxu0 0.0
    %1664 = vmatpush1.msra.mxu0 0.0
    %1665 = vmatprep.subr.mxu0 0.0
    %1666 = vmatpush1.msra.mxu0 0.0
    %1667 = vmatprep.subr.mxu0 0.0
    %1668 = vmatpush1.msra.mxu0 0.0
    %1669 = vmatprep.subr.mxu0 0.0
    %1670 = vmatpush1.msra.mxu0 0.0
    %1671 = vmatprep.subr.mxu0 0.0
    %1672 = vmatpush1.msra.mxu0 0.0
    %1673 = vmatprep.subr.mxu0 0.0
    %1674 = vmatpush1.msra.mxu0 0.0
    %1675 = vmatprep.subr.mxu0 0.0
    %1676 = vmatpush1.msra.mxu0 0.0
    %1677 = vmatprep.subr.mxu0 0.0
    %1678 = vmatpush1.msra.mxu0 0.0
    %1679 = vmatprep.subr.mxu0 0.0
    %1680 = vmatpush1.msra.mxu0 0.0
    %1681 = vmatprep.subr.mxu0 0.0
    %1682 = vmatpush1.msra.mxu0 0.0
    %1683 = vmatprep.subr.mxu0 0.0
    %1684 = vmatpush1.msra.mxu0 0.0
    %1685 = vmatprep.subr.mxu0 0.0
    %1686 = vmatpush1.msra.mxu0 0.0
    %1687 = vmatprep.subr.mxu0 0.0
    %1688 = vmatpush1.msra.mxu0 0.0
    %1689 = vmatprep.subr.mxu0 0.0
    %1690 = vmatpush1.msra.mxu0 0.0
    %1691 = vmatprep.subr.mxu0 0.0
    %1692 = vmatpush1.msra.mxu0 0.0
    %1693 = vmatprep.subr.mxu0 0.0
    %1694 = vmatpush1.msra.mxu0 0.0
    %1695 = vmatprep.subr.mxu0 0.0
    %1696 = vmatpush1.msra.mxu0 0.0
    %1697 = vmatprep.subr.mxu0 0.0
    %1698 = vmatpush1.msra.mxu0 0.0
    %1699 = vmatprep.subr.mxu0 0.0
    %1700 = vmatpush1.msra.mxu0 0.0
    %1701 = vmatprep.mubr.f32.mxu0 0.0
    %1702 = vmatmul.mubr.f32.gmra.mrb[0].mxu0 %v1239
    %v1703 = vpop.f32.mrb[0].mxu0
    %v1704 = vadd.f32 0.0, %v1703
    %v1705 = vpop.f32.mrb[0].mxu0
    %1706 = vdwg.mxu0
    %s1707 = scalar_lea.vmem %s2, 144
    %v1708 = vld [vmem:[%s1707] sm:$0xff]
    %v1709 = vld [vmem:[%s1707 + $0x8] sm:$0x3]
    %v1711 = vsel %vm77, %v1709, 0
    %1713 = vmatprep.subr.mxu0 0.0
    %1714 = vmatpush1.msra.mxu0 %v1708
    %1715 = vmatprep.subr.mxu0 0.0
    %1716 = vmatpush1.msra.mxu0 %v1711
    %1717 = vmatprep.subr.mxu0 0.0
    %1718 = vmatpush1.msra.mxu0 0.0
    %1719 = vmatprep.subr.mxu0 0.0
    %1720 = vmatpush1.msra.mxu0 0.0
    %1721 = vmatprep.subr.mxu0 0.0
    %1722 = vmatpush1.msra.mxu0 0.0
    %1723 = vmatprep.subr.mxu0 0.0
    %1724 = vmatpush1.msra.mxu0 0.0
    %1725 = vmatprep.subr.mxu0 0.0
    %1726 = vmatpush1.msra.mxu0 0.0
    %1727 = vmatprep.subr.mxu0 0.0
    %1728 = vmatpush1.msra.mxu0 0.0
    %1729 = vmatprep.subr.mxu0 0.0
    %1730 = vmatpush1.msra.mxu0 0.0
    %1731 = vmatprep.subr.mxu0 0.0
    %1732 = vmatpush1.msra.mxu0 0.0
    %1733 = vmatprep.subr.mxu0 0.0
    %1734 = vmatpush1.msra.mxu0 0.0
    %1735 = vmatprep.subr.mxu0 0.0
    %1736 = vmatpush1.msra.mxu0 0.0
    %1737 = vmatprep.subr.mxu0 0.0
    %1738 = vmatpush1.msra.mxu0 0.0
    %1739 = vmatprep.subr.mxu0 0.0
    %1740 = vmatpush1.msra.mxu0 0.0
    %1741 = vmatprep.subr.mxu0 0.0
    %1742 = vmatpush1.msra.mxu0 0.0
    %1743 = vmatprep.subr.mxu0 0.0
    %1744 = vmatpush1.msra.mxu0 0.0
    %1745 = vmatprep.subr.mxu0 0.0
    %1746 = vmatpush1.msra.mxu0 0.0
    %1747 = vmatprep.subr.mxu0 0.0
    %1748 = vmatpush1.msra.mxu0 0.0
    %1749 = vmatprep.subr.mxu0 0.0
    %1750 = vmatpush1.msra.mxu0 0.0
    %1751 = vmatprep.subr.mxu0 0.0
    %1752 = vmatpush1.msra.mxu0 0.0
    %1753 = vmatprep.subr.mxu0 0.0
    %1754 = vmatpush1.msra.mxu0 0.0
    %1755 = vmatprep.subr.mxu0 0.0
    %1756 = vmatpush1.msra.mxu0 0.0
    %1757 = vmatprep.subr.mxu0 0.0
    %1758 = vmatpush1.msra.mxu0 0.0
    %1759 = vmatprep.subr.mxu0 0.0
    %1760 = vmatpush1.msra.mxu0 0.0
    %1761 = vmatprep.subr.mxu0 0.0
    %1762 = vmatpush1.msra.mxu0 0.0
    %1763 = vmatprep.subr.mxu0 0.0
    %1764 = vmatpush1.msra.mxu0 0.0
    %1765 = vmatprep.subr.mxu0 0.0
    %1766 = vmatpush1.msra.mxu0 0.0
    %1767 = vmatprep.subr.mxu0 0.0
    %1768 = vmatpush1.msra.mxu0 0.0
    %1769 = vmatprep.subr.mxu0 0.0
    %1770 = vmatpush1.msra.mxu0 0.0
    %1771 = vmatprep.subr.mxu0 0.0
    %1772 = vmatpush1.msra.mxu0 0.0
    %1773 = vmatprep.subr.mxu0 0.0
    %1774 = vmatpush1.msra.mxu0 0.0
    %1775 = vmatprep.subr.mxu0 0.0
    %1776 = vmatpush1.msra.mxu0 0.0
    %1777 = vmatprep.mubr.f32.mxu0 0.0
    %1778 = vmatmul.mubr.f32.gmra.mrb[0].mxu0 %v1239
    %v1779 = vpop.f32.mrb[0].mxu0
    %v1780 = vadd.f32 0.0, %v1779
    %v1781 = vpop.f32.mrb[0].mxu0
    %1782 = vdwg.mxu0
    %s1783 = scalar_lea.vmem %s2, 176
    %v1784 = vld [vmem:[%s1783] sm:$0xff]
    %v1785 = vld [vmem:[%s1783 + $0x8] sm:$0x3]
    %v1787 = vsel %vm77, %v1785, 0
    %1789 = vmatprep.subr.mxu0 0.0
    %1790 = vmatpush1.msra.mxu0 %v1784
    %1791 = vmatprep.subr.mxu0 0.0
    %1792 = vmatpush1.msra.mxu0 %v1787
    %1793 = vmatprep.subr.mxu0 0.0
    %1794 = vmatpush1.msra.mxu0 0.0
    %1795 = vmatprep.subr.mxu0 0.0
    %1796 = vmatpush1.msra.mxu0 0.0
    %1797 = vmatprep.subr.mxu0 0.0
    %1798 = vmatpush1.msra.mxu0 0.0
    %1799 = vmatprep.subr.mxu0 0.0
    %1800 = vmatpush1.msra.mxu0 0.0
    %1801 = vmatprep.subr.mxu0 0.0
    %1802 = vmatpush1.msra.mxu0 0.0
    %1803 = vmatprep.subr.mxu0 0.0
    %1804 = vmatpush1.msra.mxu0 0.0
    %1805 = vmatprep.subr.mxu0 0.0
    %1806 = vmatpush1.msra.mxu0 0.0
    %1807 = vmatprep.subr.mxu0 0.0
    %1808 = vmatpush1.msra.mxu0 0.0
    %1809 = vmatprep.subr.mxu0 0.0
    %1810 = vmatpush1.msra.mxu0 0.0
    %1811 = vmatprep.subr.mxu0 0.0
    %1812 = vmatpush1.msra.mxu0 0.0
    %1813 = vmatprep.subr.mxu0 0.0
    %1814 = vmatpush1.msra.mxu0 0.0
    %1815 = vmatprep.subr.mxu0 0.0
    %1816 = vmatpush1.msra.mxu0 0.0
    %1817 = vmatprep.subr.mxu0 0.0
    %1818 = vmatpush1.msra.mxu0 0.0
    %1819 = vmatprep.subr.mxu0 0.0
    %1820 = vmatpush1.msra.mxu0 0.0
    %1821 = vmatprep.subr.mxu0 0.0
    %1822 = vmatpush1.msra.mxu0 0.0
    %1823 = vmatprep.subr.mxu0 0.0
    %1824 = vmatpush1.msra.mxu0 0.0
    %1825 = vmatprep.subr.mxu0 0.0
    %1826 = vmatpush1.msra.mxu0 0.0
    %1827 = vmatprep.subr.mxu0 0.0
    %1828 = vmatpush1.msra.mxu0 0.0
    %1829 = vmatprep.subr.mxu0 0.0
    %1830 = vmatpush1.msra.mxu0 0.0
    %1831 = vmatprep.subr.mxu0 0.0
    %1832 = vmatpush1.msra.mxu0 0.0
    %1833 = vmatprep.subr.mxu0 0.0
    %1834 = vmatpush1.msra.mxu0 0.0
    %1835 = vmatprep.subr.mxu0 0.0
    %1836 = vmatpush1.msra.mxu0 0.0
    %1837 = vmatprep.subr.mxu0 0.0
    %1838 = vmatpush1.msra.mxu0 0.0
    %1839 = vmatprep.subr.mxu0 0.0
    %1840 = vmatpush1.msra.mxu0 0.0
    %1841 = vmatprep.subr.mxu0 0.0
    %1842 = vmatpush1.msra.mxu0 0.0
    %1843 = vmatprep.subr.mxu0 0.0
    %1844 = vmatpush1.msra.mxu0 0.0
    %1845 = vmatprep.subr.mxu0 0.0
    %1846 = vmatpush1.msra.mxu0 0.0
    %1847 = vmatprep.subr.mxu0 0.0
    %1848 = vmatpush1.msra.mxu0 0.0
    %1849 = vmatprep.subr.mxu0 0.0
    %1850 = vmatpush1.msra.mxu0 0.0
    %1851 = vmatprep.subr.mxu0 0.0
    %1852 = vmatpush1.msra.mxu0 0.0
    %1853 = vmatprep.mubr.f32.mxu0 0.0
    %1854 = vmatmul.mubr.f32.gmra.mrb[0].mxu0 %v1239
    %v1855 = vpop.f32.mrb[0].mxu0
    %v1856 = vadd.f32 0.0, %v1855
    %v1857 = vpop.f32.mrb[0].mxu0
    %1858 = vdwg.mxu0
    %v1860 = vsel %vm303, %v1704, 0
    %v1863 = vsel %vm303, %v1780, 0
    %1865 = vmatprep.subr.mxu0 0.0
    %1866 = vmatpush1.xpose.msra.mxu0 %v1863
    %1867 = vmatprep.subr.mxu0 0.0
    %1868 = vmatpush1.xpose.msra.mxu0 0.0
    %1869 = vmatprep.subr.mxu0 0.0
    %1870 = vmatpush1.xpose.msra.mxu0 0.0
    %1871 = vmatprep.subr.mxu0 0.0
    %1872 = vmatpush1.xpose.msra.mxu0 0.0
    %1873 = vmatprep.subr.mxu0 0.0
    %1874 = vmatpush1.xpose.msra.mxu0 0.0
    %1875 = vmatprep.subr.mxu0 0.0
    %1876 = vmatpush1.xpose.msra.mxu0 0.0
    %1877 = vmatprep.subr.mxu0 0.0
    %1878 = vmatpush1.xpose.msra.mxu0 0.0
    %1879 = vmatprep.subr.mxu0 0.0
    %1880 = vmatpush1.xpose.msra.mxu0 0.0
    %1881 = vmatprep.subr.mxu0 0.0
    %1882 = vmatpush1.xpose.msra.mxu0 0.0
    %1883 = vmatprep.subr.mxu0 0.0
    %1884 = vmatpush1.xpose.msra.mxu0 0.0
    %1885 = vmatprep.subr.mxu0 0.0
    %1886 = vmatpush1.xpose.msra.mxu0 0.0
    %1887 = vmatprep.subr.mxu0 0.0
    %1888 = vmatpush1.xpose.msra.mxu0 0.0
    %1889 = vmatprep.subr.mxu0 0.0
    %1890 = vmatpush1.xpose.msra.mxu0 0.0
    %1891 = vmatprep.subr.mxu0 0.0
    %1892 = vmatpush1.xpose.msra.mxu0 0.0
    %1893 = vmatprep.subr.mxu0 0.0
    %1894 = vmatpush1.xpose.msra.mxu0 0.0
    %1895 = vmatprep.subr.mxu0 0.0
    %1896 = vmatpush1.xpose.msra.mxu0 0.0
    %1897 = vmatprep.subr.mxu0 0.0
    %1898 = vmatpush1.xpose.msra.mxu0 0.0
    %1899 = vmatprep.subr.mxu0 0.0
    %1900 = vmatpush1.xpose.msra.mxu0 0.0
    %1901 = vmatprep.subr.mxu0 0.0
    %1902 = vmatpush1.xpose.msra.mxu0 0.0
    %1903 = vmatprep.subr.mxu0 0.0
    %1904 = vmatpush1.xpose.msra.mxu0 0.0
    %1905 = vmatprep.subr.mxu0 0.0
    %1906 = vmatpush1.xpose.msra.mxu0 0.0
    %1907 = vmatprep.subr.mxu0 0.0
    %1908 = vmatpush1.xpose.msra.mxu0 0.0
    %1909 = vmatprep.subr.mxu0 0.0
    %1910 = vmatpush1.xpose.msra.mxu0 0.0
    %1911 = vmatprep.subr.mxu0 0.0
    %1912 = vmatpush1.xpose.msra.mxu0 0.0
    %1913 = vmatprep.subr.mxu0 0.0
    %1914 = vmatpush1.xpose.msra.mxu0 0.0
    %1915 = vmatprep.subr.mxu0 0.0
    %1916 = vmatpush1.xpose.msra.mxu0 0.0
    %1917 = vmatprep.subr.mxu0 0.0
    %1918 = vmatpush1.xpose.msra.mxu0 0.0
    %1919 = vmatprep.subr.mxu0 0.0
    %1920 = vmatpush1.xpose.msra.mxu0 0.0
    %1921 = vmatprep.subr.mxu0 0.0
    %1922 = vmatpush1.xpose.msra.mxu0 0.0
    %1923 = vmatprep.subr.mxu0 0.0
    %1924 = vmatpush1.xpose.msra.mxu0 0.0
    %1925 = vmatprep.subr.mxu0 0.0
    %1926 = vmatpush1.xpose.msra.mxu0 0.0
    %1927 = vmatprep.subr.mxu0 0.0
    %1928 = vmatpush1.xpose.msra.mxu0 0.0
    %1929 = vmatprep.mubr.f32.mxu0 0.0
    %1930 = vmatmul.mubr.f32.gmra.mrb[0].mxu0 %v1860
    %v1931 = vpop.f32.mrb[0].mxu0
    %v1932 = vadd.f32 %v43, %v1931
    %v1933 = vpop.f32.mrb[0].mxu0
    %1934 = vdwg.mxu0
    %v1935 = vsel %vm380, %v1932, -inf
    %1936 = vmax.xlane.f32.xlu0 %v1935
    %v1937 = vpop.xlane.xlu0 %1936
    %v1938 = vsub.f32 %v1932, %v1937
    %v1939 = vmul.f32 %v1938, 1.442695
    %v1940 = vpow.pop %v1939
    %v1941 = vsel %vm380, %v1940, 0.0
    %1942 = vadd.xlane.f32.xlu0 %v1941
    %v1943 = vpop.xlane.xlu0 %1942
    %v1944 = vrcp.pop %v1943
    %v1945 = vmul.f32 %v1940, %v1944
    %v1947 = vsel %vm392, %v1945, 0
    %v1950 = vsel %vm396, %v1856, 0
    %1952 = vmatprep.subr.mxu0 0.0
    %1953 = vmatpush1.msra.mxu0 %v1950
    %1954 = vmatprep.subr.mxu0 0.0
    %1955 = vmatpush1.msra.mxu0 0.0
    %1956 = vmatprep.subr.mxu0 0.0
    %1957 = vmatpush1.msra.mxu0 0.0
    %1958 = vmatprep.subr.mxu0 0.0
    %1959 = vmatpush1.msra.mxu0 0.0
    %1960 = vmatprep.subr.mxu0 0.0
    %1961 = vmatpush1.msra.mxu0 0.0
    %1962 = vmatprep.subr.mxu0 0.0
    %1963 = vmatpush1.msra.mxu0 0.0
    %1964 = vmatprep.subr.mxu0 0.0
    %1965 = vmatpush1.msra.mxu0 0.0
    %1966 = vmatprep.subr.mxu0 0.0
    %1967 = vmatpush1.msra.mxu0 0.0
    %1968 = vmatprep.subr.mxu0 0.0
    %1969 = vmatpush1.msra.mxu0 0.0
    %1970 = vmatprep.subr.mxu0 0.0
    %1971 = vmatpush1.msra.mxu0 0.0
    %1972 = vmatprep.subr.mxu0 0.0
    %1973 = vmatpush1.msra.mxu0 0.0
    %1974 = vmatprep.subr.mxu0 0.0
    %1975 = vmatpush1.msra.mxu0 0.0
    %1976 = vmatprep.subr.mxu0 0.0
    %1977 = vmatpush1.msra.mxu0 0.0
    %1978 = vmatprep.subr.mxu0 0.0
    %1979 = vmatpush1.msra.mxu0 0.0
    %1980 = vmatprep.subr.mxu0 0.0
    %1981 = vmatpush1.msra.mxu0 0.0
    %1982 = vmatprep.subr.mxu0 0.0
    %1983 = vmatpush1.msra.mxu0 0.0
    %1984 = vmatprep.subr.mxu0 0.0
    %1985 = vmatpush1.msra.mxu0 0.0
    %1986 = vmatprep.subr.mxu0 0.0
    %1987 = vmatpush1.msra.mxu0 0.0
    %1988 = vmatprep.subr.mxu0 0.0
    %1989 = vmatpush1.msra.mxu0 0.0
    %1990 = vmatprep.subr.mxu0 0.0
    %1991 = vmatpush1.msra.mxu0 0.0
    %1992 = vmatprep.subr.mxu0 0.0
    %1993 = vmatpush1.msra.mxu0 0.0
    %1994 = vmatprep.subr.mxu0 0.0
    %1995 = vmatpush1.msra.mxu0 0.0
    %1996 = vmatprep.subr.mxu0 0.0
    %1997 = vmatpush1.msra.mxu0 0.0
    %1998 = vmatprep.subr.mxu0 0.0
    %1999 = vmatpush1.msra.mxu0 0.0
    %2000 = vmatprep.subr.mxu0 0.0
    %2001 = vmatpush1.msra.mxu0 0.0
    %2002 = vmatprep.subr.mxu0 0.0
    %2003 = vmatpush1.msra.mxu0 0.0
    %2004 = vmatprep.subr.mxu0 0.0
    %2005 = vmatpush1.msra.mxu0 0.0
    %2006 = vmatprep.subr.mxu0 0.0
    %2007 = vmatpush1.msra.mxu0 0.0
    %2008 = vmatprep.subr.mxu0 0.0
    %2009 = vmatpush1.msra.mxu0 0.0
    %2010 = vmatprep.subr.mxu0 0.0
    %2011 = vmatpush1.msra.mxu0 0.0
    %2012 = vmatprep.subr.mxu0 0.0
    %2013 = vmatpush1.msra.mxu0 0.0
    %2014 = vmatprep.subr.mxu0 0.0
    %2015 = vmatpush1.msra.mxu0 0.0
    %2016 = vmatprep.mubr.f32.mxu0 0.0
    %2017 = vmatmul.mubr.f32.gmra.mrb[0].mxu0 %v1947
    %v2018 = vpop.f32.mrb[0].mxu0
    %v2019 = vadd.f32 0.0, %v2018
    %v2020 = vpop.f32.mrb[0].mxu0
    %2021 = vdwg.mxu0
    %s2022 = scalar_lea.vmem %s3, 24
    %v2023 = vld [vmem:[%s2022] sm:$0x1f]
    %v2025 = vsel %vm303, %v2019, 0
    %v2028 = vsel %vm867, %v2023, 0
    %2030 = vmatprep.subr.mxu0 0.0
    %2031 = vmatpush1.msra.mxu0 %v2028
    %2032 = vmatprep.subr.mxu0 0.0
    %2033 = vmatpush1.msra.mxu0 0.0
    %2034 = vmatprep.subr.mxu0 0.0
    %2035 = vmatpush1.msra.mxu0 0.0
    %2036 = vmatprep.subr.mxu0 0.0
    %2037 = vmatpush1.msra.mxu0 0.0
    %2038 = vmatprep.subr.mxu0 0.0
    %2039 = vmatpush1.msra.mxu0 0.0
    %2040 = vmatprep.subr.mxu0 0.0
    %2041 = vmatpush1.msra.mxu0 0.0
    %2042 = vmatprep.subr.mxu0 0.0
    %2043 = vmatpush1.msra.mxu0 0.0
    %2044 = vmatprep.subr.mxu0 0.0
    %2045 = vmatpush1.msra.mxu0 0.0
    %2046 = vmatprep.subr.mxu0 0.0
    %2047 = vmatpush1.msra.mxu0 0.0
    %2048 = vmatprep.subr.mxu0 0.0
    %2049 = vmatpush1.msra.mxu0 0.0
    %2050 = vmatprep.subr.mxu0 0.0
    %2051 = vmatpush1.msra.mxu0 0.0
    %2052 = vmatprep.subr.mxu0 0.0
    %2053 = vmatpush1.msra.mxu0 0.0
    %2054 = vmatprep.subr.mxu0 0.0
    %2055 = vmatpush1.msra.mxu0 0.0
    %2056 = vmatprep.subr.mxu0 0.0
    %2057 = vmatpush1.msra.mxu0 0.0
    %2058 = vmatprep.subr.mxu0 0.0
    %2059 = vmatpush1.msra.mxu0 0.0
    %2060 = vmatprep.subr.mxu0 0.0
    %2061 = vmatpush1.msra.mxu0 0.0
    %2062 = vmatprep.subr.mxu0 0.0
    %2063 = vmatpush1.msra.mxu0 0.0
    %2064 = vmatprep.subr.mxu0 0.0
    %2065 = vmatpush1.msra.mxu0 0.0
    %2066 = vmatprep.subr.mxu0 0.0
    %2067 = vmatpush1.msra.mxu0 0.0
    %2068 = vmatprep.subr.mxu0 0.0
    %2069 = vmatpush1.msra.mxu0 0.0
    %2070 = vmatprep.subr.mxu0 0.0
    %2071 = vmatpush1.msra.mxu0 0.0
    %2072 = vmatprep.subr.mxu0 0.0
    %2073 = vmatpush1.msra.mxu0 0.0
    %2074 = vmatprep.subr.mxu0 0.0
    %2075 = vmatpush1.msra.mxu0 0.0
    %2076 = vmatprep.subr.mxu0 0.0
    %2077 = vmatpush1.msra.mxu0 0.0
    %2078 = vmatprep.subr.mxu0 0.0
    %2079 = vmatpush1.msra.mxu0 0.0
    %2080 = vmatprep.subr.mxu0 0.0
    %2081 = vmatpush1.msra.mxu0 0.0
    %2082 = vmatprep.subr.mxu0 0.0
    %2083 = vmatpush1.msra.mxu0 0.0
    %2084 = vmatprep.subr.mxu0 0.0
    %2085 = vmatpush1.msra.mxu0 0.0
    %2086 = vmatprep.subr.mxu0 0.0
    %2087 = vmatpush1.msra.mxu0 0.0
    %2088 = vmatprep.subr.mxu0 0.0
    %2089 = vmatpush1.msra.mxu0 0.0
    %2090 = vmatprep.subr.mxu0 0.0
    %2091 = vmatpush1.msra.mxu0 0.0
    %2092 = vmatprep.subr.mxu0 0.0
    %2093 = vmatpush1.msra.mxu0 0.0
    %2094 = vmatprep.mubr.f32.mxu0 0.0
    %2095 = vmatmul.mubr.f32.gmra.mrb[0].mxu0 %v2025
    %v2096 = vpop.f32.mrb[0].mxu0
    %v2097 = vadd.f32 0.0, %v2096
    %v2098 = vpop.f32.mrb[0].mxu0
    %2099 = vdwg.mxu0
    %v2101 = vsel %vm303, %v1626, 0
    %v2104 = vsel %vm867, %v1630, 0
    %2106 = vmatprep.subr.mxu0 0.0
    %2107 = vmatpush1.msra.mxu0 %v2104
    %2108 = vmatprep.subr.mxu0 0.0
    %2109 = vmatpush1.msra.mxu0 0.0
    %2110 = vmatprep.subr.mxu0 0.0
    %2111 = vmatpush1.msra.mxu0 0.0
    %2112 = vmatprep.subr.mxu0 0.0
    %2113 = vmatpush1.msra.mxu0 0.0
    %2114 = vmatprep.subr.mxu0 0.0
    %2115 = vmatpush1.msra.mxu0 0.0
    %2116 = vmatprep.subr.mxu0 0.0
    %2117 = vmatpush1.msra.mxu0 0.0
    %2118 = vmatprep.subr.mxu0 0.0
    %2119 = vmatpush1.msra.mxu0 0.0
    %2120 = vmatprep.subr.mxu0 0.0
    %2121 = vmatpush1.msra.mxu0 0.0
    %2122 = vmatprep.subr.mxu0 0.0
    %2123 = vmatpush1.msra.mxu0 0.0
    %2124 = vmatprep.subr.mxu0 0.0
    %2125 = vmatpush1.msra.mxu0 0.0
    %2126 = vmatprep.subr.mxu0 0.0
    %2127 = vmatpush1.msra.mxu0 0.0
    %2128 = vmatprep.subr.mxu0 0.0
    %2129 = vmatpush1.msra.mxu0 0.0
    %2130 = vmatprep.subr.mxu0 0.0
    %2131 = vmatpush1.msra.mxu0 0.0
    %2132 = vmatprep.subr.mxu0 0.0
    %2133 = vmatpush1.msra.mxu0 0.0
    %2134 = vmatprep.subr.mxu0 0.0
    %2135 = vmatpush1.msra.mxu0 0.0
    %2136 = vmatprep.subr.mxu0 0.0
    %2137 = vmatpush1.msra.mxu0 0.0
    %2138 = vmatprep.subr.mxu0 0.0
    %2139 = vmatpush1.msra.mxu0 0.0
    %2140 = vmatprep.subr.mxu0 0.0
    %2141 = vmatpush1.msra.mxu0 0.0
    %2142 = vmatprep.subr.mxu0 0.0
    %2143 = vmatpush1.msra.mxu0 0.0
    %2144 = vmatprep.subr.mxu0 0.0
    %2145 = vmatpush1.msra.mxu0 0.0
    %2146 = vmatprep.subr.mxu0 0.0
    %2147 = vmatpush1.msra.mxu0 0.0
    %2148 = vmatprep.subr.mxu0 0.0
    %2149 = vmatpush1.msra.mxu0 0.0
    %2150 = vmatprep.subr.mxu0 0.0
    %2151 = vmatpush1.msra.mxu0 0.0
    %2152 = vmatprep.subr.mxu0 0.0
    %2153 = vmatpush1.msra.mxu0 0.0
    %2154 = vmatprep.subr.mxu0 0.0
    %2155 = vmatpush1.msra.mxu0 0.0
    %2156 = vmatprep.subr.mxu0 0.0
    %2157 = vmatpush1.msra.mxu0 0.0
    %2158 = vmatprep.subr.mxu0 0.0
    %2159 = vmatpush1.msra.mxu0 0.0
    %2160 = vmatprep.subr.mxu0 0.0
    %2161 = vmatpush1.msra.mxu0 0.0
    %2162 = vmatprep.subr.mxu0 0.0
    %2163 = vmatpush1.msra.mxu0 0.0
    %2164 = vmatprep.subr.mxu0 0.0
    %2165 = vmatpush1.msra.mxu0 0.0
    %2166 = vmatprep.subr.mxu0 0.0
    %2167 = vmatpush1.msra.mxu0 0.0
    %2168 = vmatprep.subr.mxu0 0.0
    %2169 = vmatpush1.msra.mxu0 0.0
    %2170 = vmatprep.mubr.f32.mxu0 0.0
    %2171 = vmatmul.mubr.f32.gmra.mrb[0].mxu0 %v2101
    %v2172 = vpop.f32.mrb[0].mxu0
    %v2173 = vadd.f32 %v2097, %v2172
    %v2174 = vpop.f32.mrb[0].mxu0
    %2175 = vdwg.mxu0
    %v2176 = vadd.f32 %v1209, %v2173
    %v2177 = vld [vmem:[%s4 + $0x3] sm:$0x1]
    %v2178 = vld [vmem:[%s5 + $0x3] sm:$0x1]
    %v2179 = vsel %vm46, %v2176, 0.0
    %2180 = vadd.xlane.f32.xlu0 %v2179
    %v2181 = vpop.xlane.xlu0 %2180
    %v2182 = vmul.f32 %v2181, %v50
    %v2183 = vsub.f32 %v2176, %v2182
    %v2184 = vmul.f32 %v2183, %v2183
    %v2185 = vsel %vm46, %v2184, 0.0
    %2186 = vadd.xlane.f32.xlu0 %v2185
    %v2187 = vpop.xlane.xlu0 %2186
    %v2188 = vmul.f32 %v2187, %v50
    %v2189 = vadd.f32 %v2188, 1e-06
    %v2190 = vrsqrt.pop %v2189
    %v2191 = vmul.f32 %v2183, %v2190
    %v2192 = vlaneseq
    %v2193 = vshrl.u32 %v2192, 7
    %v2194 = vsub.s32 0, %v2193
    %v2195 = vrot.slane %v2177, %v2194
    %v2196 = vmul.f32 %v2191, %v2195
    %v2197 = vlaneseq
    %v2198 = vshrl.u32 %v2197, 7
    %v2199 = vsub.s32 0, %v2198
    %v2200 = vrot.slane %v2178, %v2199
    %v2201 = vadd.f32 %v2196, %v2200
    %s2202 = scalar_lea.vmem %s6, 16
    %v2203 = vld [vmem:[%s2202] sm:$0xff]
    %v2204 = vld [vmem:[%s2202 + $0x8] sm:$0x3]
    %v2205 = vld [vmem:[%s7 + $0x1] sm:$0x1]
    %v2206 = vlaneseq
    %v2207 = vshrl.u32 %v2206, 7
    %v2208 = vsub.s32 0, %v2207
    %v2209 = vrot.slane %v2205, %v2208
    %v2211 = vsel %vm73, %v2201, 0
    %v2214 = vsel %vm77, %v2204, 0
    %2216 = vmatprep.subr.mxu0 0.0
    %2217 = vmatpush1.msra.mxu0 %v2203
    %2218 = vmatprep.subr.mxu0 0.0
    %2219 = vmatpush1.msra.mxu0 %v2214
    %2220 = vmatprep.subr.mxu0 0.0
    %2221 = vmatpush1.msra.mxu0 0.0
    %2222 = vmatprep.subr.mxu0 0.0
    %2223 = vmatpush1.msra.mxu0 0.0
    %2224 = vmatprep.subr.mxu0 0.0
    %2225 = vmatpush1.msra.mxu0 0.0
    %2226 = vmatprep.subr.mxu0 0.0
    %2227 = vmatpush1.msra.mxu0 0.0
    %2228 = vmatprep.subr.mxu0 0.0
    %2229 = vmatpush1.msra.mxu0 0.0
    %2230 = vmatprep.subr.mxu0 0.0
    %2231 = vmatpush1.msra.mxu0 0.0
    %2232 = vmatprep.subr.mxu0 0.0
    %2233 = vmatpush1.msra.mxu0 0.0
    %2234 = vmatprep.subr.mxu0 0.0
    %2235 = vmatpush1.msra.mxu0 0.0
    %2236 = vmatprep.subr.mxu0 0.0
    %2237 = vmatpush1.msra.mxu0 0.0
    %2238 = vmatprep.subr.mxu0 0.0
    %2239 = vmatpush1.msra.mxu0 0.0
    %2240 = vmatprep.subr.mxu0 0.0
    %2241 = vmatpush1.msra.mxu0 0.0
    %2242 = vmatprep.subr.mxu0 0.0
    %2243 = vmatpush1.msra.mxu0 0.0
    %2244 = vmatprep.subr.mxu0 0.0
    %2245 = vmatpush1.msra.mxu0 0.0
    %2246 = vmatprep.subr.mxu0 0.0
    %2247 = vmatpush1.msra.mxu0 0.0
    %2248 = vmatprep.subr.mxu0 0.0
    %2249 = vmatpush1.msra.mxu0 0.0
    %2250 = vmatprep.subr.mxu0 0.0
    %2251 = vmatpush1.msra.mxu0 0.0
    %2252 = vmatprep.subr.mxu0 0.0
    %2253 = vmatpush1.msra.mxu0 0.0
    %2254 = vmatprep.subr.mxu0 0.0
    %2255 = vmatpush1.msra.mxu0 0.0
    %2256 = vmatprep.subr.mxu0 0.0
    %2257 = vmatpush1.msra.mxu0 0.0
    %2258 = vmatprep.subr.mxu0 0.0
    %2259 = vmatpush1.msra.mxu0 0.0
    %2260 = vmatprep.subr.mxu0 0.0
    %2261 = vmatpush1.msra.mxu0 0.0
    %2262 = vmatprep.subr.mxu0 0.0
    %2263 = vmatpush1.msra.mxu0 0.0
    %2264 = vmatprep.subr.mxu0 0.0
    %2265 = vmatpush1.msra.mxu0 0.0
    %2266 = vmatprep.subr.mxu0 0.0
    %2267 = vmatpush1.msra.mxu0 0.0
    %2268 = vmatprep.subr.mxu0 0.0
    %2269 = vmatpush1.msra.mxu0 0.0
    %2270 = vmatprep.subr.mxu0 0.0
    %2271 = vmatpush1.msra.mxu0 0.0
    %2272 = vmatprep.subr.mxu0 0.0
    %2273 = vmatpush1.msra.mxu0 0.0
    %2274 = vmatprep.subr.mxu0 0.0
    %2275 = vmatpush1.msra.mxu0 0.0
    %2276 = vmatprep.subr.mxu0 0.0
    %2277 = vmatpush1.msra.mxu0 0.0
    %2278 = vmatprep.subr.mxu0 0.0
    %2279 = vmatpush1.msra.mxu0 0.0
    %2280 = vmatprep.mubr.f32.mxu0 0.0
    %2281 = vmatmul.mubr.f32.gmra.mrb[0].mxu0 %v2211
    %v2282 = vpop.f32.mrb[0].mxu0
    %v2283 = vadd.f32 %v2209, %v2282
    %v2284 = vpop.f32.mrb[0].mxu0
    %2285 = vdwg.mxu0
    %v2286 = vmax.f32 %v2283, 0.0
    %s2287 = scalar_lea.vmem %s8, 24
    %v2288 = vld [vmem:[%s2287] sm:$0xff]
    %v2289 = vld [vmem:[%s2287 + $0x8] sm:$0xff]
    %v2290 = vld [vmem:[%s2287 + $0x10] sm:$0xff]
    %v2291 = vld [vmem:[%s9 + $0x1] sm:$0x1]
    %v2292 = vlaneseq
    %v2293 = vshrl.u32 %v2292, 7
    %v2294 = vsub.s32 0, %v2293
    %v2295 = vrot.slane %v2291, %v2294
    %v2297 = vsel %vm1135, %v2286, 0
    %2299 = vmatprep.subr.mxu0 0.0
    %2300 = vmatpush1.msra.mxu0 %v2288
    %2301 = vmatprep.subr.mxu0 0.0
    %2302 = vmatpush1.msra.mxu0 %v2289
    %2303 = vmatprep.subr.mxu0 0.0
    %2304 = vmatpush1.msra.mxu0 %v2290
    %2305 = vmatprep.subr.mxu0 0.0
    %2306 = vmatpush1.msra.mxu0 0.0
    %2307 = vmatprep.subr.mxu0 0.0
    %2308 = vmatpush1.msra.mxu0 0.0
    %2309 = vmatprep.subr.mxu0 0.0
    %2310 = vmatpush1.msra.mxu0 0.0
    %2311 = vmatprep.subr.mxu0 0.0
    %2312 = vmatpush1.msra.mxu0 0.0
    %2313 = vmatprep.subr.mxu0 0.0
    %2314 = vmatpush1.msra.mxu0 0.0
    %2315 = vmatprep.subr.mxu0 0.0
    %2316 = vmatpush1.msra.mxu0 0.0
    %2317 = vmatprep.subr.mxu0 0.0
    %2318 = vmatpush1.msra.mxu0 0.0
    %2319 = vmatprep.subr.mxu0 0.0
    %2320 = vmatpush1.msra.mxu0 0.0
    %2321 = vmatprep.subr.mxu0 0.0
    %2322 = vmatpush1.msra.mxu0 0.0
    %2323 = vmatprep.subr.mxu0 0.0
    %2324 = vmatpush1.msra.mxu0 0.0
    %2325 = vmatprep.subr.mxu0 0.0
    %2326 = vmatpush1.msra.mxu0 0.0
    %2327 = vmatprep.subr.mxu0 0.0
    %2328 = vmatpush1.msra.mxu0 0.0
    %2329 = vmatprep.subr.mxu0 0.0
    %2330 = vmatpush1.msra.mxu0 0.0
    %2331 = vmatprep.subr.mxu0 0.0
    %2332 = vmatpush1.msra.mxu0 0.0
    %2333 = vmatprep.subr.mxu0 0.0
    %2334 = vmatpush1.msra.mxu0 0.0
    %2335 = vmatprep.subr.mxu0 0.0
    %2336 = vmatpush1.msra.mxu0 0.0
    %2337 = vmatprep.subr.mxu0 0.0
    %2338 = vmatpush1.msra.mxu0 0.0
    %2339 = vmatprep.subr.mxu0 0.0
    %2340 = vmatpush1.msra.mxu0 0.0
    %2341 = vmatprep.subr.mxu0 0.0
    %2342 = vmatpush1.msra.mxu0 0.0
    %2343 = vmatprep.subr.mxu0 0.0
    %2344 = vmatpush1.msra.mxu0 0.0
    %2345 = vmatprep.subr.mxu0 0.0
    %2346 = vmatpush1.msra.mxu0 0.0
    %2347 = vmatprep.subr.mxu0 0.0
    %2348 = vmatpush1.msra.mxu0 0.0
    %2349 = vmatprep.subr.mxu0 0.0
    %2350 = vmatpush1.msra.mxu0 0.0
    %2351 = vmatprep.subr.mxu0 0.0
    %2352 = vmatpush1.msra.mxu0 0.0
    %2353 = vmatprep.subr.mxu0 0.0
    %2354 = vmatpush1.msra.mxu0 0.0
    %2355 = vmatprep.subr.mxu0 0.0
    %2356 = vmatpush1.msra.mxu0 0.0
    %2357 = vmatprep.subr.mxu0 0.0
    %2358 = vmatpush1.msra.mxu0 0.0
    %2359 = vmatprep.subr.mxu0 0.0
    %2360 = vmatpush1.msra.mxu0 0.0
    %2361 = vmatprep.subr.mxu0 0.0
    %2362 = vmatpush1.msra.mxu0 0.0
    %2363 = vmatprep.mubr.f32.mxu0 0.0
    %2364 = vmatmul.mubr.f32.gmra.mrb[0].mxu0 %v2297
    %v2365 = vpop.f32.mrb[0].mxu0
    %v2366 = vadd.f32 %v2295, %v2365
    %v2367 = vpop.f32.mrb[0].mxu0
    %2368 = vdwg.mxu0
    %v2369 = vadd.f32 %v2176, %v2366
    %v2370 = vld [vmem:[%s4 + $0x4] sm:$0x1]
    %v2371 = vld [vmem:[%s5 + $0x4] sm:$0x1]
    %v2372 = vsel %vm46, %v2369, 0.0
    %2373 = vadd.xlane.f32.xlu0 %v2372
    %v2374 = vpop.xlane.xlu0 %2373
    %v2375 = vmul.f32 %v2374, %v50
    %v2376 = vsub.f32 %v2369, %v2375
    %v2377 = vmul.f32 %v2376, %v2376
    %v2378 = vsel %vm46, %v2377, 0.0
    %2379 = vadd.xlane.f32.xlu0 %v2378
    %v2380 = vpop.xlane.xlu0 %2379
    %v2381 = vmul.f32 %v2380, %v50
    %v2382 = vadd.f32 %v2381, 1e-06
    %v2383 = vrsqrt.pop %v2382
    %v2384 = vmul.f32 %v2376, %v2383
    %v2385 = vlaneseq
    %v2386 = vshrl.u32 %v2385, 7
    %v2387 = vsub.s32 0, %v2386
    %v2388 = vrot.slane %v2370, %v2387
    %v2389 = vmul.f32 %v2384, %v2388
    %v2390 = vlaneseq
    %v2391 = vshrl.u32 %v2390, 7
    %v2392 = vsub.s32 0, %v2391
    %v2393 = vrot.slane %v2371, %v2392
    %v2394 = vadd.f32 %v2389, %v2393
    %v2395 = vld [vmem:[%s10] sm:$0xff]
    %v2396 = vld [vmem:[%s10 + $0x8] sm:$0x3]
    %v2397 = vld [vmem:[%s11] sm:$0x1]
    %v2399 = vlaneseq
    %v2400 = vshrl.u32 %v2399, 7
    %v2401 = vsub.s32 0, %v2400
    %v2402 = vrot.slane %v2397, %v2401
    %v2405 = vsel %vm73, %v2394, 0
    %v2408 = vsel %vm77, %v2396, 0
    %2410 = vmatprep.subr.mxu0 0.0
    %2411 = vmatpush1.msra.mxu0 %v2395
    %2412 = vmatprep.subr.mxu0 0.0
    %2413 = vmatpush1.msra.mxu0 %v2408
    %2414 = vmatprep.subr.mxu0 0.0
    %2415 = vmatpush1.msra.mxu0 0.0
    %2416 = vmatprep.subr.mxu0 0.0
    %2417 = vmatpush1.msra.mxu0 0.0
    %2418 = vmatprep.subr.mxu0 0.0
    %2419 = vmatpush1.msra.mxu0 0.0
    %2420 = vmatprep.subr.mxu0 0.0
    %2421 = vmatpush1.msra.mxu0 0.0
    %2422 = vmatprep.subr.mxu0 0.0
    %2423 = vmatpush1.msra.mxu0 0.0
    %2424 = vmatprep.subr.mxu0 0.0
    %2425 = vmatpush1.msra.mxu0 0.0
    %2426 = vmatprep.subr.mxu0 0.0
    %2427 = vmatpush1.msra.mxu0 0.0
    %2428 = vmatprep.subr.mxu0 0.0
    %2429 = vmatpush1.msra.mxu0 0.0
    %2430 = vmatprep.subr.mxu0 0.0
    %2431 = vmatpush1.msra.mxu0 0.0
    %2432 = vmatprep.subr.mxu0 0.0
    %2433 = vmatpush1.msra.mxu0 0.0
    %2434 = vmatprep.subr.mxu0 0.0
    %2435 = vmatpush1.msra.mxu0 0.0
    %2436 = vmatprep.subr.mxu0 0.0
    %2437 = vmatpush1.msra.mxu0 0.0
    %2438 = vmatprep.subr.mxu0 0.0
    %2439 = vmatpush1.msra.mxu0 0.0
    %2440 = vmatprep.subr.mxu0 0.0
    %2441 = vmatpush1.msra.mxu0 0.0
    %2442 = vmatprep.subr.mxu0 0.0
    %2443 = vmatpush1.msra.mxu0 0.0
    %2444 = vmatprep.subr.mxu0 0.0
    %2445 = vmatpush1.msra.mxu0 0.0
    %2446 = vmatprep.subr.mxu0 0.0
    %2447 = vmatpush1.msra.mxu0 0.0
    %2448 = vmatprep.subr.mxu0 0.0
    %2449 = vmatpush1.msra.mxu0 0.0
    %2450 = vmatprep.subr.mxu0 0.0
    %2451 = vmatpush1.msra.mxu0 0.0
    %2452 = vmatprep.subr.mxu0 0.0
    %2453 = vmatpush1.msra.mxu0 0.0
    %2454 = vmatprep.subr.mxu0 0.0
    %2455 = vmatpush1.msra.mxu0 0.0
    %2456 = vmatprep.subr.mxu0 0.0
    %2457 = vmatpush1.msra.mxu0 0.0
    %2458 = vmatprep.subr.mxu0 0.0
    %2459 = vmatpush1.msra.mxu0 0.0
    %2460 = vmatprep.subr.mxu0 0.0
    %2461 = vmatpush1.msra.mxu0 0.0
    %2462 = vmatprep.subr.mxu0 0.0
    %2463 = vmatpush1.msra.mxu0 0.0
    %2464 = vmatprep.subr.mxu0 0.0
    %2465 = vmatpush1.msra.mxu0 0.0
    %2466 = vmatprep.subr.mxu0 0.0
    %2467 = vmatpush1.msra.mxu0 0.0
    %2468 = vmatprep.subr.mxu0 0.0
    %2469 = vmatpush1.msra.mxu0 0.0
    %2470 = vmatprep.subr.mxu0 0.0
    %2471 = vmatpush1.msra.mxu0 0.0
    %2472 = vmatprep.subr.mxu0 0.0
    %2473 = vmatpush1.msra.mxu0 0.0
    %2474 = vmatprep.mubr.f32.mxu0 0.0
    %2475 = vmatmul.mubr.f32.gmra.mrb[0].mxu0 %v2405
    %v2476 = vpop.f32.mrb[0].mxu0
    %v2477 = vadd.f32 %v2402, %v2476
    %v2478 = vpop.f32.mrb[0].mxu0
    %2479 = vdwg.mxu0
    %2480 = vst.msk [vmem:[#allocation2] sm:$0x3f] %vm46, %v2477
    // Predicated region
    $region50: #{tpu_custom_call.1} parent=1 // pred_check
      _
    $region51: #{tpu_custom_call.1} parent=1 // pred_check_branch
      %2482 = sbr.rel (0) target = $region53
    $region52: #{tpu_custom_call.1} parent=1 // pred_region
      %s2484 = ssub.s32 128, 128
      %2485 = vsyncadd [#allocation3], %s2484
      %s2487 = sshll.u32 [#allocation2], 4
      %s2488 = int_to_ptr.vmem [resolvable:$true] %s2487
      %2490 = dma.vmem_to_hbm [thread:$0]  %s2488, 128, %s12, [#allocation3]
    $region53: #{tpu_custom_call.1} parent=1 // pred_fallthru
      _
    // Predicated region
    $region54: #{tpu_custom_call.1} parent=1 // pred_check
      _
    $region55: #{tpu_custom_call.1} parent=1 // pred_check_branch
      %2492 = sbr.rel (0) target = $region57
    $region56: #{tpu_custom_call.1} parent=1 // pred_region
      %2493 = dma.done [#allocation3], 128
    $region57: #{tpu_custom_call.1} parent=1 // pred_fallthru
      _
    %2494 = vsyncpa [#allocation3], 1

</llo_original>
